<compile_context>
chip_gen: v7x
topology: tpu7x:2x2x1
jax: 0.10.0
libtpu: 0.0.40
codegen_flags: <defaults>
</compile_context>

<pallas_src>
import jax
import jax.numpy as jnp
from jax.experimental import pallas as pl
from jax.experimental.pallas import tpu as pltpu

# -------------------- model hyper-params (small, synthetic) --------------------
B = 2          # batch
L = 16         # sequence length
D = 128        # embedding dim
HEAD_DIM = 64
NUM_HEADS = D // HEAD_DIM
MLP_RATIO = 4.0
HIDDEN = int(D * MLP_RATIO)
LN_EPS = 1e-5
SCALE = HEAD_DIM ** (-0.5)


def _layernorm(x, gamma):
    # One-pass statistics: sum and sum-of-squares are independent reductions
    # (no serial mu -> var dependency).  Biased variance, matching PyTorch.
    n = x.shape[-1]
    s1 = jnp.sum(x, axis=-1, keepdims=True)
    s2 = jnp.sum(x * x, axis=-1, keepdims=True)
    mu = s1 * (1.0 / n)
    var = s2 * (1.0 / n) - mu * mu
    return (x - mu) * jax.lax.rsqrt(var + LN_EPS) * gamma


def _transformer_block_kernel(x_ref, g1_ref, wqkv_ref, wproj_ref, g2_ref,
                              w1_ref, w2_ref, o_ref):
    m_blk = x_ref.shape[0]          # rows handled by this program (= bt * L)
    bt = m_blk // L                 # batch elements handled by this program

    x = x_ref[...].astype(jnp.float32)                        # (M, D)

    # ---------------- LayerNorm 1 (no bias) ----------------
    xn1 = _layernorm(x, g1_ref[...])                          # (M, D)

    # ---------------- fused QKV projection: one lane-dense matmul -----------
    # bf16 operands, f32 accumulation.  SCALE already folded into Q columns.
    qkv = jnp.dot(xn1.astype(jnp.bfloat16), wqkv_ref[...],
                  preferred_element_type=jnp.float32)         # (M, 3D)
    qkv_bf = qkv.astype(jnp.bfloat16)

    def split_heads(t2d):
        # (M, H*hd) -> (H*bt, L, hd); merged batch dim is head-major
        # (g = h*bt + b).  Only static lane slices + leading-dim reshapes.
        parts = [t2d[:, h * HEAD_DIM:(h + 1) * HEAD_DIM]
                 for h in range(NUM_HEADS)]
        return jnp.stack(parts, axis=0).reshape(NUM_HEADS * bt, L, HEAD_DIM)

    qh = split_heads(qkv_bf[:, 0:D])                          # (G, L, hd)
    kh = split_heads(qkv_bf[:, D:2 * D])
    vh = split_heads(qkv_bf[:, 2 * D:3 * D])

    # ---------------- attention: single batched einsums over (heads*batch) --
    s = jnp.einsum('gqd,gkd->gqk', qh, kh,
                   preferred_element_type=jnp.float32)        # (G, L, L)
    s = s - jnp.max(s, axis=-1, keepdims=True)
    p = jnp.exp(s)
    p = p * pl.reciprocal(jnp.sum(p, axis=-1, keepdims=True), approx=True)
    ao = jnp.einsum('gqk,gkd->gqd', p.astype(jnp.bfloat16), vh,
                    preferred_element_type=jnp.float32)       # (G, L, hd)

    # ---------------- output projection (per-head weights, summed) ----------
    # (G, L, hd) -> (H, M, hd) is a trivial leading-dim reinterpretation.
    ao_h = ao.reshape(NUM_HEADS, m_blk, HEAD_DIM).astype(jnp.bfloat16)
    proj = jnp.einsum('hmd,hdo->hmo', ao_h, wproj_ref[...],
                      preferred_element_type=jnp.float32)     # (H, M, D)
    x1 = x + jnp.sum(proj, axis=0)                            # residual

    # ---------------- LayerNorm 2 + MLP (fc1 -> GELU -> fc2) ----------------
    xn2 = _layernorm(x1, g2_ref[...])
    h = jnp.dot(xn2.astype(jnp.bfloat16), w1_ref[...],
                preferred_element_type=jnp.float32)           # (M, HIDDEN)
    # tanh-approx GELU runs on the EUP (exact erf is a long VALU polynomial).
    # Keep approximate=False if strict parity with torch.nn.GELU() is required.
    h = jax.nn.gelu(h, approximate=True)
    mlp = jnp.dot(h.astype(jnp.bfloat16), w2_ref[...],
                  preferred_element_type=jnp.float32)         # (M, D)

    o_ref[...] = (x1 + mlp).astype(o_ref.dtype)


def pack_weights(norm1_w, w_qkv, w_proj, norm2_w, w_fc1, w_fc2):
    """One-time weight packing (PyTorch (out,in) layout -> kernel layout).

    Hoisted out of the per-call hot path; call once, reuse the result.
    nn.Linear computes y = x @ W.T, so linear weights are pre-transposed.
    """
    wqkv_t = w_qkv.T.astype(jnp.float32)                 # (D, 3D), cols [q|k|v]
    wqkv_t = wqkv_t.at[:, 0:D].multiply(SCALE)           # fold attn scale into Q
    wqkv_b = wqkv_t.astype(jnp.bfloat16)                 # (D, 3D)
    wproj_h = w_proj.T.reshape(NUM_HEADS, HEAD_DIM, D).astype(jnp.bfloat16)
    w1_t = w_fc1.T.astype(jnp.bfloat16)                  # (D, HIDDEN)
    w2_t = w_fc2.T.astype(jnp.bfloat16)                  # (HIDDEN, D)
    g1 = norm1_w.reshape(1, D).astype(jnp.float32)
    g2 = norm2_w.reshape(1, D).astype(jnp.float32)
    return g1, wqkv_b, wproj_h, g2, w1_t, w2_t


def transformer_block(x, g1, wqkv_b, wproj_h, g2, w1_t, w2_t,
                      *, num_batch_splits=1):
    """Fused TransformerBlock forward on packed weights (see pack_weights).

    x: (B, L, D) f32.  num_batch_splits: keep 1 on all generations (splitting
    duplicates weight DMA for negligible compute); only raise if measured.
    """
    b, l, d = x.shape
    assert d == D and l == L and b % num_batch_splits == 0
    m = b * l
    m_blk = m // num_batch_splits

    x2d = x.reshape(m, d)

    const2 = lambda i: (0, 0)
    const3 = lambda i: (0, 0, 0)

    grid_spec = pltpu.PrefetchScalarGridSpec(
        num_scalar_prefetch=0,
        grid=(num_batch_splits,),
        in_specs=[
            pl.BlockSpec((m_blk, d), lambda i: (i, 0)),           # x rows
            pl.BlockSpec((1, d), const2),                         # norm1 weight
            pl.BlockSpec((D, 3 * D), const2),                     # fused Wqkv (Q scaled)
            pl.BlockSpec((NUM_HEADS, HEAD_DIM, D), const3),       # Wproj (per head)
            pl.BlockSpec((1, d), const2),                         # norm2 weight
            pl.BlockSpec((D, HIDDEN), const2),                    # fc1 weight
            pl.BlockSpec((HIDDEN, D), const2),                    # fc2 weight
        ],
        out_specs=pl.BlockSpec((m_blk, d), lambda i: (i, 0)),
    )

    # Advisory cost estimate so XLA schedules around this tiny custom call.
    flops = (2 * m * (D * 3 * D + D * D + 2 * D * HIDDEN)         # projections + MLP
             + 2 * 2 * (b * NUM_HEADS) * L * L * HEAD_DIM)        # QK^T + PV
    transcendentals = (b * NUM_HEADS * L * L                      # softmax exp
                       + m * HIDDEN                               # gelu tanh
                       + 2 * m)                                   # layernorm rsqrt
    bytes_accessed = (2 * m * d * 4 + 2 * d * 4
                      + (D * 3 * D + NUM_HEADS * HEAD_DIM * D
                         + D * HIDDEN + HIDDEN * D) * 2)

    out2d = pl.pallas_call(
        _transformer_block_kernel,
        out_shape=jax.ShapeDtypeStruct((m, d), x.dtype),
        grid_spec=grid_spec,
        compiler_params=pltpu.CompilerParams(
            dimension_semantics=("parallel",),
            vmem_limit_bytes=32 * 1024 * 1024),
        cost_estimate=pl.CostEstimate(
            flops=flops,
            transcendentals=transcendentals,
            bytes_accessed=bytes_accessed),
    )(x2d, g1, wqkv_b, wproj_h, g2, w1_t, w2_t)
    return out2d.reshape(b, l, d)


def _reference(x, norm1_w, w_qkv, w_proj, norm2_w, w_fc1, w_fc2):
    """Pure-JAX f32 reference matching the PyTorch module's forward."""
    def ln(t, g):
        mu = jnp.mean(t, -1, keepdims=True)
        var = jnp.mean((t - mu) ** 2, -1, keepdims=True)
        return (t - mu) * jax.lax.rsqrt(var + LN_EPS) * g

    b, l, d = x.shape
    xn1 = ln(x, norm1_w)
    qkv = (xn1 @ w_qkv.T).reshape(b, l, 3, NUM_HEADS, HEAD_DIM)
    qkv = qkv.transpose(2, 0, 3, 1, 4)
    q, k, v = qkv[0], qkv[1], qkv[2]                               # (B, H, L, hd)
    attn = jax.nn.softmax(jnp.einsum('bhqd,bhkd->bhqk', q, k) * SCALE, axis=-1)
    ao = jnp.einsum('bhqk,bhkd->bhqd', attn, v)
    ao = ao.transpose(0, 2, 1, 3).reshape(b, l, d)
    x1 = x + ao @ w_proj.T
    xn2 = ln(x1, norm2_w)
    hdn = jax.nn.gelu(xn2 @ w_fc1.T, approximate=False)            # torch default
    return x1 + hdn @ w_fc2.T


if __name__ == "__main__":
    key = jax.random.PRNGKey(0)
    kx, kqkv, kproj, k1, k2 = jax.random.split(key, 5)

    x = jax.random.normal(kx, (B, L, D), dtype=jnp.float32)

    # PyTorch nn.Linear weight layout: (out_features, in_features)
    w_qkv = jax.random.normal(kqkv, (3 * D, D), dtype=jnp.float32) * 0.02
    w_proj = jax.random.normal(kproj, (D, D), dtype=jnp.float32) * 0.02
    w_fc1 = jax.random.normal(k1, (HIDDEN, D), dtype=jnp.float32) * 0.02
    w_fc2 = jax.random.normal(k2, (D, HIDDEN), dtype=jnp.float32) * 0.02
    norm1_w = jnp.ones((D,), dtype=jnp.float32)
    norm2_w = jnp.ones((D,), dtype=jnp.float32)

    # One-time weight packing, hoisted out of the per-call path.
    packed = jax.tree_util.tree_map(
        jax.block_until_ready,
        pack_weights(norm1_w, w_qkv, w_proj, norm2_w, w_fc1, w_fc2))

    fwd = jax.jit(transformer_block)
    out = jax.block_until_ready(fwd(x, *packed))

    assert out.shape == (B, L, D)
    assert bool(jnp.all(jnp.isfinite(out)))

    ref = _reference(x, norm1_w, w_qkv, w_proj, norm2_w, w_fc1, w_fc2)
    # bf16 MXU operands + approx reciprocal + tanh-GELU -> loose tolerance vs
    # the f32 exact-erf reference.
    assert bool(jnp.allclose(out, ref, atol=3e-2, rtol=3e-2))

    print("KERNEL_OK")
</pallas_src>

<mosaic_0001>
module attributes {stable_mosaic.version = 11 : i64} {
  func.func @_transformer_block_kernel(%arg0: i32, %arg1: memref<32x128xf32, #tpu.memory_space<vmem>>, %arg2: memref<1x128xf32, #tpu.memory_space<vmem>>, %arg3: memref<128x384xbf16, #tpu.memory_space<vmem>>, %arg4: memref<2x64x128xbf16, #tpu.memory_space<vmem>>, %arg5: memref<1x128xf32, #tpu.memory_space<vmem>>, %arg6: memref<128x512xbf16, #tpu.memory_space<vmem>>, %arg7: memref<512x128xbf16, #tpu.memory_space<vmem>>, %arg8: memref<32x128xf32, #tpu.memory_space<vmem>>) attributes {dimension_semantics = [#tpu.dimension_semantics<parallel>], iteration_bounds = array<i64: 1>, scalar_prefetch = 0 : i64, scratch_operands = 0 : i64, tpu.core_type = #tpu.core_type<tc>, window_params = [{transform_indices = @transform_0, window_bounds = array<i64: 32, 128>}, {pipeline_mode = #tpu.pipeline_mode<synchronous>, transform_indices = @transform_1, window_bounds = array<i64: 1, 128>}, {pipeline_mode = #tpu.pipeline_mode<synchronous>, transform_indices = @transform_2, window_bounds = array<i64: 128, 384>}, {pipeline_mode = #tpu.pipeline_mode<synchronous>, transform_indices = @transform_3, window_bounds = array<i64: 2, 64, 128>}, {pipeline_mode = #tpu.pipeline_mode<synchronous>, transform_indices = @transform_4, window_bounds = array<i64: 1, 128>}, {pipeline_mode = #tpu.pipeline_mode<synchronous>, transform_indices = @transform_5, window_bounds = array<i64: 128, 512>}, {pipeline_mode = #tpu.pipeline_mode<synchronous>, transform_indices = @transform_6, window_bounds = array<i64: 512, 128>}, {transform_indices = @transform_7, window_bounds = array<i64: 32, 128>}]} {
    %c0 = arith.constant 0 : index
    %c0_0 = arith.constant 0 : index
    %0 = vector.load %arg1[%c0, %c0_0] : memref<32x128xf32, #tpu.memory_space<vmem>>, vector<32x128xf32>
    %c0_1 = arith.constant 0 : index
    %c0_2 = arith.constant 0 : index
    %1 = vector.load %arg2[%c0_1, %c0_2] : memref<1x128xf32, #tpu.memory_space<vmem>>, vector<1x128xf32>
    %cst = arith.constant dense<0.000000e+00> : vector<32xf32>
    %2 = vector.multi_reduction <add>, %0, %cst [1] : vector<32x128xf32> to vector<32xf32>
    %3 = vector.shape_cast %2 : vector<32xf32> to vector<32x1xf32>
    %4 = arith.mulf %0, %0 : vector<32x128xf32>
    %cst_3 = arith.constant dense<0.000000e+00> : vector<32xf32>
    %5 = vector.multi_reduction <add>, %4, %cst_3 [1] : vector<32x128xf32> to vector<32xf32>
    %6 = vector.shape_cast %5 : vector<32xf32> to vector<32x1xf32>
    %cst_4 = arith.constant 7.812500e-03 : f32
    %7 = vector.broadcast %cst_4 : f32 to vector<32x1xf32>
    %8 = arith.mulf %3, %7 : vector<32x1xf32>
    %cst_5 = arith.constant 7.812500e-03 : f32
    %9 = vector.broadcast %cst_5 : f32 to vector<32x1xf32>
    %10 = arith.mulf %6, %9 : vector<32x1xf32>
    %11 = arith.mulf %8, %8 : vector<32x1xf32>
    %12 = arith.subf %10, %11 : vector<32x1xf32>
    %13 = vector.broadcast %8 : vector<32x1xf32> to vector<32x128xf32>
    %14 = arith.subf %0, %13 : vector<32x128xf32>
    %cst_6 = arith.constant 9.99999974E-6 : f32
    %15 = vector.broadcast %cst_6 : f32 to vector<32x1xf32>
    %16 = arith.addf %12, %15 : vector<32x1xf32>
    %17 = math.rsqrt %16 : vector<32x1xf32>
    %18 = vector.broadcast %17 : vector<32x1xf32> to vector<32x128xf32>
    %19 = arith.mulf %14, %18 : vector<32x128xf32>
    %20 = vector.broadcast %1 : vector<1x128xf32> to vector<32x128xf32>
    %21 = arith.mulf %19, %20 : vector<32x128xf32>
    %22 = arith.truncf %21 : vector<32x128xf32> to vector<32x128xbf16>
    %c0_7 = arith.constant 0 : index
    %c0_8 = arith.constant 0 : index
    %23 = vector.load %arg3[%c0_7, %c0_8] : memref<128x384xbf16, #tpu.memory_space<vmem>>, vector<128x384xbf16>
    %cst_9 = arith.constant dense<0.000000e+00> : vector<32x384xf32>
    %24 = tpu.matmul %22, %23, %cst_9 {dimension_numbers = #tpu.dot_dimension_numbers<[1], [0], [0], [1], [0, 0, 1, 1], [], []>} : vector<32x128xbf16>, vector<128x384xbf16>, vector<32x384xf32> -> vector<32x384xf32>
    %25 = arith.truncf %24 : vector<32x384xf32> to vector<32x384xbf16>
    %26 = vector.extract_strided_slice %25 {offsets = [0, 0], sizes = [32, 128], strides = [1, 1]} : vector<32x384xbf16> to vector<32x128xbf16>
    %27 = vector.extract_strided_slice %26 {offsets = [0, 0], sizes = [32, 64], strides = [1, 1]} : vector<32x128xbf16> to vector<32x64xbf16>
    %28 = vector.extract_strided_slice %26 {offsets = [0, 64], sizes = [32, 64], strides = [1, 1]} : vector<32x128xbf16> to vector<32x64xbf16>
    %29 = vector.shape_cast %27 : vector<32x64xbf16> to vector<1x32x64xbf16>
    %30 = vector.shape_cast %28 : vector<32x64xbf16> to vector<1x32x64xbf16>
    %31 = tpu.concatenate %29, %30 in 0 : vector<1x32x64xbf16>, vector<1x32x64xbf16> -> vector<2x32x64xbf16>
    %32 = vector.shape_cast %31 : vector<2x32x64xbf16> to vector<4x16x64xbf16>
    %33 = vector.extract_strided_slice %25 {offsets = [0, 128], sizes = [32, 128], strides = [1, 1]} : vector<32x384xbf16> to vector<32x128xbf16>
    %34 = vector.extract_strided_slice %33 {offsets = [0, 0], sizes = [32, 64], strides = [1, 1]} : vector<32x128xbf16> to vector<32x64xbf16>
    %35 = vector.extract_strided_slice %33 {offsets = [0, 64], sizes = [32, 64], strides = [1, 1]} : vector<32x128xbf16> to vector<32x64xbf16>
    %36 = vector.shape_cast %34 : vector<32x64xbf16> to vector<1x32x64xbf16>
    %37 = vector.shape_cast %35 : vector<32x64xbf16> to vector<1x32x64xbf16>
    %38 = tpu.concatenate %36, %37 in 0 : vector<1x32x64xbf16>, vector<1x32x64xbf16> -> vector<2x32x64xbf16>
    %39 = vector.shape_cast %38 : vector<2x32x64xbf16> to vector<4x16x64xbf16>
    %40 = vector.extract_strided_slice %25 {offsets = [0, 256], sizes = [32, 128], strides = [1, 1]} : vector<32x384xbf16> to vector<32x128xbf16>
    %41 = vector.extract_strided_slice %40 {offsets = [0, 0], sizes = [32, 64], strides = [1, 1]} : vector<32x128xbf16> to vector<32x64xbf16>
    %42 = vector.extract_strided_slice %40 {offsets = [0, 64], sizes = [32, 64], strides = [1, 1]} : vector<32x128xbf16> to vector<32x64xbf16>
    %43 = vector.shape_cast %41 : vector<32x64xbf16> to vector<1x32x64xbf16>
    %44 = vector.shape_cast %42 : vector<32x64xbf16> to vector<1x32x64xbf16>
    %45 = tpu.concatenate %43, %44 in 0 : vector<1x32x64xbf16>, vector<1x32x64xbf16> -> vector<2x32x64xbf16>
    %46 = vector.shape_cast %45 : vector<2x32x64xbf16> to vector<4x16x64xbf16>
    "tpu.trace_start"() <{level = 10 : i32, message = "gqd,gkd->gqk"}> : () -> ()
    %cst_10 = arith.constant dense<0.000000e+00> : vector<4x16x16xf32>
    %47 = tpu.matmul %32, %39, %cst_10 {dimension_numbers = #tpu.dot_dimension_numbers<[2], [2], [1], [1], [0, 0, 0, 1, 1, 1], [0], [0]>} : vector<4x16x64xbf16>, vector<4x16x64xbf16>, vector<4x16x16xf32> -> vector<4x16x16xf32>
    "tpu.trace_stop"() : () -> ()
    %cst_11 = arith.constant dense<0xFF800000> : vector<4x16xf32>
    %48 = vector.multi_reduction <maximumf>, %47, %cst_11 [2] : vector<4x16x16xf32> to vector<4x16xf32>
    %49 = vector.shape_cast %48 : vector<4x16xf32> to vector<4x16x1xf32>
    %50 = vector.broadcast %49 : vector<4x16x1xf32> to vector<4x16x16xf32>
    %51 = arith.subf %47, %50 : vector<4x16x16xf32>
    %52 = math.exp %51 : vector<4x16x16xf32>
    %cst_12 = arith.constant dense<0.000000e+00> : vector<4x16xf32>
    %53 = vector.multi_reduction <add>, %52, %cst_12 [2] : vector<4x16x16xf32> to vector<4x16xf32>
    %54 = vector.shape_cast %53 : vector<4x16xf32> to vector<4x16x1xf32>
    %55 = tpu.reciprocal %54 {approx = true} : vector<4x16x1xf32> -> vector<4x16x1xf32>
    %56 = vector.broadcast %55 : vector<4x16x1xf32> to vector<4x16x16xf32>
    %57 = arith.mulf %52, %56 : vector<4x16x16xf32>
    %58 = arith.truncf %57 : vector<4x16x16xf32> to vector<4x16x16xbf16>
    "tpu.trace_start"() <{level = 10 : i32, message = "gqk,gkd->gqd"}> : () -> ()
    %cst_13 = arith.constant dense<0.000000e+00> : vector<4x16x64xf32>
    %59 = tpu.matmul %58, %46, %cst_13 {dimension_numbers = #tpu.dot_dimension_numbers<[2], [1], [1], [2], [0, 0, 0, 1, 1, 2], [0], [0]>} : vector<4x16x16xbf16>, vector<4x16x64xbf16>, vector<4x16x64xf32> -> vector<4x16x64xf32>
    "tpu.trace_stop"() : () -> ()
    %60 = vector.shape_cast %59 : vector<4x16x64xf32> to vector<2x32x64xf32>
    %61 = arith.truncf %60 : vector<2x32x64xf32> to vector<2x32x64xbf16>
    %c0_14 = arith.constant 0 : index
    %c0_15 = arith.constant 0 : index
    %c0_16 = arith.constant 0 : index
    %62 = vector.load %arg4[%c0_14, %c0_15, %c0_16] : memref<2x64x128xbf16, #tpu.memory_space<vmem>>, vector<2x64x128xbf16>
    "tpu.trace_start"() <{level = 10 : i32, message = "hmd,hdo->hmo"}> : () -> ()
    %cst_17 = arith.constant dense<0.000000e+00> : vector<2x32x128xf32>
    %63 = tpu.matmul %61, %62, %cst_17 {dimension_numbers = #tpu.dot_dimension_numbers<[2], [1], [1], [2], [0, 0, 0, 1, 1, 2], [0], [0]>} : vector<2x32x64xbf16>, vector<2x64x128xbf16>, vector<2x32x128xf32> -> vector<2x32x128xf32>
    "tpu.trace_stop"() : () -> ()
    %cst_18 = arith.constant dense<0.000000e+00> : vector<32x128xf32>
    %64 = vector.multi_reduction <add>, %63, %cst_18 [0] : vector<2x32x128xf32> to vector<32x128xf32>
    %65 = arith.addf %0, %64 : vector<32x128xf32>
    %c0_19 = arith.constant 0 : index
    %c0_20 = arith.constant 0 : index
    %66 = vector.load %arg5[%c0_19, %c0_20] : memref<1x128xf32, #tpu.memory_space<vmem>>, vector<1x128xf32>
    %cst_21 = arith.constant dense<0.000000e+00> : vector<32xf32>
    %67 = vector.multi_reduction <add>, %65, %cst_21 [1] : vector<32x128xf32> to vector<32xf32>
    %68 = vector.shape_cast %67 : vector<32xf32> to vector<32x1xf32>
    %69 = arith.mulf %65, %65 : vector<32x128xf32>
    %cst_22 = arith.constant dense<0.000000e+00> : vector<32xf32>
    %70 = vector.multi_reduction <add>, %69, %cst_22 [1] : vector<32x128xf32> to vector<32xf32>
    %71 = vector.shape_cast %70 : vector<32xf32> to vector<32x1xf32>
    %cst_23 = arith.constant 7.812500e-03 : f32
    %72 = vector.broadcast %cst_23 : f32 to vector<32x1xf32>
    %73 = arith.mulf %68, %72 : vector<32x1xf32>
    %cst_24 = arith.constant 7.812500e-03 : f32
    %74 = vector.broadcast %cst_24 : f32 to vector<32x1xf32>
    %75 = arith.mulf %71, %74 : vector<32x1xf32>
    %76 = arith.mulf %73, %73 : vector<32x1xf32>
    %77 = arith.subf %75, %76 : vector<32x1xf32>
    %78 = vector.broadcast %73 : vector<32x1xf32> to vector<32x128xf32>
    %79 = arith.subf %65, %78 : vector<32x128xf32>
    %cst_25 = arith.constant 9.99999974E-6 : f32
    %80 = vector.broadcast %cst_25 : f32 to vector<32x1xf32>
    %81 = arith.addf %77, %80 : vector<32x1xf32>
    %82 = math.rsqrt %81 : vector<32x1xf32>
    %83 = vector.broadcast %82 : vector<32x1xf32> to vector<32x128xf32>
    %84 = arith.mulf %79, %83 : vector<32x128xf32>
    %85 = vector.broadcast %66 : vector<1x128xf32> to vector<32x128xf32>
    %86 = arith.mulf %84, %85 : vector<32x128xf32>
    %87 = arith.truncf %86 : vector<32x128xf32> to vector<32x128xbf16>
    %c0_26 = arith.constant 0 : index
    %c0_27 = arith.constant 0 : index
    %88 = vector.load %arg6[%c0_26, %c0_27] : memref<128x512xbf16, #tpu.memory_space<vmem>>, vector<128x512xbf16>
    %cst_28 = arith.constant dense<0.000000e+00> : vector<32x512xf32>
    %89 = tpu.matmul %87, %88, %cst_28 {dimension_numbers = #tpu.dot_dimension_numbers<[1], [0], [0], [1], [0, 0, 1, 1], [], []>} : vector<32x128xbf16>, vector<128x512xbf16>, vector<32x512xf32> -> vector<32x512xf32>
    %90 = arith.mulf %89, %89 : vector<32x512xf32>
    %91 = arith.mulf %89, %90 : vector<32x512xf32>
    %cst_29 = arith.constant 4.471500e-02 : f32
    %92 = vector.broadcast %cst_29 : f32 to vector<32x512xf32>
    %93 = arith.mulf %92, %91 : vector<32x512xf32>
    %94 = arith.addf %89, %93 : vector<32x512xf32>
    %cst_30 = arith.constant 0.797884583 : f32
    %95 = vector.broadcast %cst_30 : f32 to vector<32x512xf32>
    %96 = arith.mulf %95, %94 : vector<32x512xf32>
    %97 = math.tanh %96 : vector<32x512xf32>
    %cst_31 = arith.constant 1.000000e+00 : f32
    %98 = vector.broadcast %cst_31 : f32 to vector<32x512xf32>
    %99 = arith.addf %98, %97 : vector<32x512xf32>
    %cst_32 = arith.constant 5.000000e-01 : f32
    %100 = vector.broadcast %cst_32 : f32 to vector<32x512xf32>
    %101 = arith.mulf %100, %99 : vector<32x512xf32>
    %102 = arith.mulf %89, %101 : vector<32x512xf32>
    %103 = arith.truncf %102 : vector<32x512xf32> to vector<32x512xbf16>
    %c0_33 = arith.constant 0 : index
    %c0_34 = arith.constant 0 : index
    %104 = vector.load %arg7[%c0_33, %c0_34] : memref<512x128xbf16, #tpu.memory_space<vmem>>, vector<512x128xbf16>
    %cst_35 = arith.constant dense<0.000000e+00> : vector<32x128xf32>
    %105 = tpu.matmul %103, %104, %cst_35 {dimension_numbers = #tpu.dot_dimension_numbers<[1], [0], [0], [1], [0, 0, 1, 1], [], []>} : vector<32x512xbf16>, vector<512x128xbf16>, vector<32x128xf32> -> vector<32x128xf32>
    %106 = arith.addf %65, %105 : vector<32x128xf32>
    %c0_36 = arith.constant 0 : index
    %c0_37 = arith.constant 0 : index
    %107 = vector.load %arg8[%c0_36, %c0_37] : memref<32x128xf32, #tpu.memory_space<vmem>>, vector<32x128xf32>
    tpu.vector_store %arg8[%c0_36, %c0_37], %106 {strides = array<i32>} : memref<32x128xf32, #tpu.memory_space<vmem>>, vector<32x128xf32>,
    return
  }
  func.func @transform_0(%arg0: i32) -> (i32, i32) {
    %c0_i32 = arith.constant 0 : i32
    %c0_i32_0 = arith.constant 0 : i32
    return %arg0, %c0_i32 : i32, i32
  }
  func.func @transform_1(%arg0: i32) -> (i32, i32) {
    %c0_i32 = arith.constant 0 : i32
    %c0_i32_0 = arith.constant 0 : i32
    %c0_i32_1 = arith.constant 0 : i32
    return %c0_i32, %c0_i32_0 : i32, i32
  }
  func.func @transform_2(%arg0: i32) -> (i32, i32) {
    %c0_i32 = arith.constant 0 : i32
    %c0_i32_0 = arith.constant 0 : i32
    %c0_i32_1 = arith.constant 0 : i32
    return %c0_i32, %c0_i32_0 : i32, i32
  }
  func.func @transform_3(%arg0: i32) -> (i32, i32, i32) {
    %c0_i32 = arith.constant 0 : i32
    %c0_i32_0 = arith.constant 0 : i32
    %c0_i32_1 = arith.constant 0 : i32
    %c0_i32_2 = arith.constant 0 : i32
    return %c0_i32, %c0_i32_0, %c0_i32_1 : i32, i32, i32
  }
  func.func @transform_4(%arg0: i32) -> (i32, i32) {
    %c0_i32 = arith.constant 0 : i32
    %c0_i32_0 = arith.constant 0 : i32
    %c0_i32_1 = arith.constant 0 : i32
    return %c0_i32, %c0_i32_0 : i32, i32
  }
  func.func @transform_5(%arg0: i32) -> (i32, i32) {
    %c0_i32 = arith.constant 0 : i32
    %c0_i32_0 = arith.constant 0 : i32
    %c0_i32_1 = arith.constant 0 : i32
    return %c0_i32, %c0_i32_0 : i32, i32
  }
  func.func @transform_6(%arg0: i32) -> (i32, i32) {
    %c0_i32 = arith.constant 0 : i32
    %c0_i32_0 = arith.constant 0 : i32
    %c0_i32_1 = arith.constant 0 : i32
    return %c0_i32, %c0_i32_0 : i32, i32
  }
  func.func @transform_7(%arg0: i32) -> (i32, i32) {
    %c0_i32 = arith.constant 0 : i32
    %c0_i32_0 = arith.constant 0 : i32
    return %arg0, %c0_i32 : i32, i32
  }
}

</mosaic_0001>

<llo_original>
// kernel: transformer_block.1
$region0: #{transformer_block.1}
  #allocation0 [shape = 'u32[]', space=smem, size = 0x4, offset = 0x4, fixed_abs, tag = 'smem constant byte address 0x4 - core index']
  #allocation1 [shape = 'u32[144,128]{1,0:T(1,128)}', space=vmem, size = 0x12000, scoped, tag = 'internal scratch']
  %s0 = inlined_call_operand.hbm [shape: f32[32,128], index: 0, kind: input, shape index: {}]
  %s1 = inlined_call_operand.vmem [shape: f32[1,128], index: 1, kind: input, shape index: {}]
  %s2 = inlined_call_operand.hbm [shape: bf16[128,384], index: 2, kind: input, shape index: {}]
  %s3 = inlined_call_operand.hbm [shape: bf16[2,64,128], index: 3, kind: input, shape index: {}]
  %s4 = inlined_call_operand.vmem [shape: f32[1,128], index: 4, kind: input, shape index: {}]
  %s5 = inlined_call_operand.hbm [shape: bf16[128,512], index: 5, kind: input, shape index: {}]
  %s6 = inlined_call_operand.hbm [shape: bf16[512,128], index: 6, kind: input, shape index: {}]
  %s7 = inlined_call_operand.hbm [shape: f32[32,128], index: 7, kind: output, shape index: {}]
  %s8 = sld [smem:[#allocation0]]
  $region58: #{transformer_block.1} parent=0
    _
  %s10 = ssub.s32 1, %s8
  %s11 = scalar_select 0, %s10, %s8
  $region1: #{transformer_block.1} parent=0
    #allocation2 [shape = 'u8[16384]{0}', space=vmem, size = 0x4000, scoped, tag = 'input window, operand 0, single buffered']
    #allocation3 [shape = 's32[1]{0}', space=sflag, size = 0x4, scoped, tag = 'scoped memory for transformer_block.1']
    #allocation4 [shape = 's32[1]{0}', space=sflag, size = 0x4, scoped, tag = 'scoped memory for transformer_block.1']
    #allocation5 [shape = 'u8[98304]{0}', space=vmem, size = 0x18000, scoped, tag = 'input window, operand 2, single buffered']
    #allocation6 [shape = 's32[1]{0}', space=sflag, size = 0x4, scoped, tag = 'scoped memory for transformer_block.1']
    #allocation7 [shape = 'u8[32768]{0}', space=vmem, size = 0x8000, scoped, tag = 'input window, operand 3, single buffered']
    #allocation8 [shape = 'u8[131072]{0}', space=vmem, size = 0x20000, scoped, tag = 'input window, operand 5, single buffered']
    #allocation9 [shape = 's32[1]{0}', space=sflag, size = 0x4, scoped, tag = 'scoped memory for transformer_block.1']
    #allocation10 [shape = 'u8[131072]{0}', space=vmem, size = 0x20000, scoped, tag = 'input window, operand 6, single buffered']
    #allocation11 [shape = 'u8[16384]{0}', space=vmem, size = 0x4000, scoped, tag = 'output window, operand 0, single buffered']
    %12 = vsyncpa [#allocation3], 0
    %13 = vsyncpa [#allocation6], 0
    %14 = vsyncpa [#allocation9], 0
    %15 = vsyncpa [#allocation4], 0
    // Predicated region
    $region2: #{transformer_block.1} parent=1 // pred_check
      _
    $region3: #{transformer_block.1} parent=1 // pred_check_branch
      %17 = sbr.rel (0) target = $region5
    $region4: #{transformer_block.1} parent=1 // pred_region
      %s19 = ssub.s32 512, 512
      %20 = vsyncadd [#allocation3], %s19
      %s21 = sshll.u32 [#allocation2], 4
      %s22 = int_to_ptr.vmem [resolvable:$true] %s21
      %27 = dma.hbm_to_vmem [thread:$0]  %s0, 512, %s22, [#allocation3], 128, 128, 8
    $region5: #{transformer_block.1} parent=1 // pred_fallthru
      _
    // Predicated region
    $region6: #{transformer_block.1} parent=1 // pred_check
      _
    $region7: #{transformer_block.1} parent=1 // pred_check_branch
      %29 = sbr.rel (0) target = $region9
    $region8: #{transformer_block.1} parent=1 // pred_region
      _
    $region9: #{transformer_block.1} parent=1 // pred_fallthru
      _
    // Predicated region
    $region10: #{transformer_block.1} parent=1 // pred_check
      _
    $region11: #{transformer_block.1} parent=1 // pred_check_branch
      %31 = sbr.rel (0) target = $region13
    $region12: #{transformer_block.1} parent=1 // pred_region
      %s33 = ssub.s32 3072, 3072
      %34 = vsyncadd [#allocation6], %s33
      %s35 = sshll.u32 [#allocation5], 4
      %s36 = int_to_ptr.vmem [resolvable:$true] %s35
      %41 = dma.hbm_to_vmem [thread:$0]  %s2, 3072, %s36, [#allocation6], 192, 192, 12
    $region13: #{transformer_block.1} parent=1 // pred_fallthru
      _
    // Predicated region
    $region14: #{transformer_block.1} parent=1 // pred_check
      _
    $region15: #{transformer_block.1} parent=1 // pred_check_branch
      %43 = sbr.rel (0) target = $region17
    $region16: #{transformer_block.1} parent=1 // pred_region
      %s45 = ssub.s32 1024, 1024
      %46 = vsyncadd [#allocation6], %s45
      %s47 = sshll.u32 [#allocation7], 4
      %s48 = int_to_ptr.vmem [resolvable:$true] %s47
      %53 = dma.hbm_to_vmem [thread:$0]  %s3, 1024, %s48, [#allocation6], 64, 64, 4
    $region17: #{transformer_block.1} parent=1 // pred_fallthru
      _
    // Predicated region
    $region18: #{transformer_block.1} parent=1 // pred_check
      _
    $region19: #{transformer_block.1} parent=1 // pred_check_branch
      %55 = sbr.rel (0) target = $region21
    $region20: #{transformer_block.1} parent=1 // pred_region
      _
    $region21: #{transformer_block.1} parent=1 // pred_fallthru
      _
    // Predicated region
    $region22: #{transformer_block.1} parent=1 // pred_check
      _
    $region23: #{transformer_block.1} parent=1 // pred_check_branch
      %57 = sbr.rel (0) target = $region25
    $region24: #{transformer_block.1} parent=1 // pred_region
      %s59 = ssub.s32 4096, 4096
      %60 = vsyncadd [#allocation9], %s59
      %s61 = sshll.u32 [#allocation8], 4
      %s62 = int_to_ptr.vmem [resolvable:$true] %s61
      %67 = dma.hbm_to_vmem [thread:$0]  %s5, 4096, %s62, [#allocation9], 256, 256, 16
    $region25: #{transformer_block.1} parent=1 // pred_fallthru
      _
    // Predicated region
    $region26: #{transformer_block.1} parent=1 // pred_check
      _
    $region27: #{transformer_block.1} parent=1 // pred_check_branch
      %69 = sbr.rel (0) target = $region29
    $region28: #{transformer_block.1} parent=1 // pred_region
      %s71 = ssub.s32 4096, 4096
      %72 = vsyncadd [#allocation9], %s71
      %s73 = sshll.u32 [#allocation10], 4
      %s74 = int_to_ptr.vmem [resolvable:$true] %s73
      %79 = dma.hbm_to_vmem [thread:$0]  %s6, 4096, %s74, [#allocation9], 64, 64, 4
    $region29: #{transformer_block.1} parent=1 // pred_fallthru
      _
    // Predicated region
    $region30: #{transformer_block.1} parent=1 // pred_check
      _
    $region31: #{transformer_block.1} parent=1 // pred_check_branch
      %81 = sbr.rel (0) target = $region33
    $region32: #{transformer_block.1} parent=1 // pred_region
      %82 = dma.done [#allocation3], 512
    $region33: #{transformer_block.1} parent=1 // pred_fallthru
      _
    // Predicated region
    $region34: #{transformer_block.1} parent=1 // pred_check
      _
    $region35: #{transformer_block.1} parent=1 // pred_check_branch
      %84 = sbr.rel (0) target = $region37
    $region36: #{transformer_block.1} parent=1 // pred_region
      %85 = dma.done [#allocation6], 3072
    $region37: #{transformer_block.1} parent=1 // pred_fallthru
      _
    // Predicated region
    $region38: #{transformer_block.1} parent=1 // pred_check
      _
    $region39: #{transformer_block.1} parent=1 // pred_check_branch
      %87 = sbr.rel (0) target = $region41
    $region40: #{transformer_block.1} parent=1 // pred_region
      %88 = dma.done [#allocation6], 1024
    $region41: #{transformer_block.1} parent=1 // pred_fallthru
      _
    // Predicated region
    $region42: #{transformer_block.1} parent=1 // pred_check
      _
    $region43: #{transformer_block.1} parent=1 // pred_check_branch
      %90 = sbr.rel (0) target = $region45
    $region44: #{transformer_block.1} parent=1 // pred_region
      %91 = dma.done [#allocation9], 4096
    $region45: #{transformer_block.1} parent=1 // pred_fallthru
      _
    // Predicated region
    $region46: #{transformer_block.1} parent=1 // pred_check
      _
    $region47: #{transformer_block.1} parent=1 // pred_check_branch
      %93 = sbr.rel (0) target = $region49
    $region48: #{transformer_block.1} parent=1 // pred_region
      %94 = dma.done [#allocation9], 4096
    $region49: #{transformer_block.1} parent=1 // pred_fallthru
      _
    %v96 = vld [vmem:[#allocation2] sm:$0xff]
    %v97 = vld [vmem:[#allocation2 + $0x8] sm:$0xff]
    %v98 = vld [vmem:[#allocation2 + $0x10] sm:$0xff]
    %v99 = vld [vmem:[#allocation2 + $0x18] sm:$0xff]
    %v100 = vld [vmem:[%s1] sm:$0x1]
    %101 = vadd.xlane.f32.xlu0 %v96
    %v102 = vpop.xlane.xlu0 %101
    %103 = vadd.xlane.f32.xlu0 %v97
    %v104 = vpop.xlane.xlu0 %103
    %105 = vadd.xlane.f32.xlu0 %v98
    %v106 = vpop.xlane.xlu0 %105
    %107 = vadd.xlane.f32.xlu0 %v99
    %v108 = vpop.xlane.xlu0 %107
    %v109 = vmul.f32 %v96, %v96
    %v110 = vmul.f32 %v97, %v97
    %v111 = vmul.f32 %v98, %v98
    %v112 = vmul.f32 %v99, %v99
    %113 = vadd.xlane.f32.xlu0 %v109
    %v114 = vpop.xlane.xlu0 %113
    %115 = vadd.xlane.f32.xlu0 %v110
    %v116 = vpop.xlane.xlu0 %115
    %117 = vadd.xlane.f32.xlu0 %v111
    %v118 = vpop.xlane.xlu0 %117
    %119 = vadd.xlane.f32.xlu0 %v112
    %v120 = vpop.xlane.xlu0 %119
    %v121 = vmul.f32 %v102, 0.0078125
    %v122 = vmul.f32 %v104, 0.0078125
    %v123 = vmul.f32 %v106, 0.0078125
    %v124 = vmul.f32 %v108, 0.0078125
    %v125 = vmul.f32 %v114, 0.0078125
    %v126 = vmul.f32 %v116, 0.0078125
    %v127 = vmul.f32 %v118, 0.0078125
    %v128 = vmul.f32 %v120, 0.0078125
    %v129 = vmul.f32 %v121, %v121
    %v130 = vmul.f32 %v122, %v122
    %v131 = vmul.f32 %v123, %v123
    %v132 = vmul.f32 %v124, %v124
    %v133 = vsub.f32 %v125, %v129
    %v134 = vsub.f32 %v126, %v130
    %v135 = vsub.f32 %v127, %v131
    %v136 = vsub.f32 %v128, %v132
    %v137 = vsub.f32 %v96, %v121
    %v138 = vsub.f32 %v97, %v122
    %v139 = vsub.f32 %v98, %v123
    %v140 = vsub.f32 %v99, %v124
    %v141 = vadd.f32 %v133, 1e-05
    %v142 = vadd.f32 %v134, 1e-05
    %v143 = vadd.f32 %v135, 1e-05
    %v144 = vadd.f32 %v136, 1e-05
    %v145 = vrsqrt.pop %v141
    %v146 = vrsqrt.pop %v142
    %v147 = vrsqrt.pop %v143
    %v148 = vrsqrt.pop %v144
    %v149 = vmul.f32 %v137, %v145
    %v150 = vmul.f32 %v138, %v146
    %v151 = vmul.f32 %v139, %v147
    %v152 = vmul.f32 %v140, %v148
    %v154 = vlaneseq
    %v155 = vshrl.u32 %v154, 7
    %v156 = vsub.s32 0, %v155
    %v157 = vrot.slane %v100, %v156
    %v159 = vmul.f32 %v149, %v157
    %v160 = vmul.f32 %v150, %v157
    %v161 = vmul.f32 %v151, %v157
    %v162 = vmul.f32 %v152, %v157
    %v163 = vpack.c.bf16 %v160, %v159
    %v164 = vpack.c.bf16 %v162, %v161
    %v165 = vld [vmem:[#allocation5] sm:$0xff]
    %v166 = vld [vmem:[#allocation5 + $0x8] sm:$0xf]
    %v167 = vld [vmem:[#allocation5 + $0xc] sm:$0xff]
    %v168 = vld [vmem:[#allocation5 + $0x14] sm:$0xf]
    %v169 = vld [vmem:[#allocation5 + $0x18] sm:$0xff]
    %v170 = vld [vmem:[#allocation5 + $0x20] sm:$0xf]
    %v171 = vld [vmem:[#allocation5 + $0x24] sm:$0xff]
    %v172 = vld [vmem:[#allocation5 + $0x2c] sm:$0xf]
    %v173 = vld [vmem:[#allocation5 + $0x30] sm:$0xff]
    %v174 = vld [vmem:[#allocation5 + $0x38] sm:$0xf]
    %v175 = vld [vmem:[#allocation5 + $0x3c] sm:$0xff]
    %v176 = vld [vmem:[#allocation5 + $0x44] sm:$0xf]
    %v177 = vld [vmem:[#allocation5 + $0x48] sm:$0xff]
    %v178 = vld [vmem:[#allocation5 + $0x50] sm:$0xf]
    %v179 = vld [vmem:[#allocation5 + $0x54] sm:$0xff]
    %v180 = vld [vmem:[#allocation5 + $0x5c] sm:$0xf]
    %v181 = vld [vmem:[#allocation5 + $0x60] sm:$0xff]
    %v182 = vld [vmem:[#allocation5 + $0x68] sm:$0xf]
    %v183 = vld [vmem:[#allocation5 + $0x6c] sm:$0xff]
    %v184 = vld [vmem:[#allocation5 + $0x74] sm:$0xf]
    %v185 = vld [vmem:[#allocation5 + $0x78] sm:$0xff]
    %v186 = vld [vmem:[#allocation5 + $0x80] sm:$0xf]
    %v187 = vld [vmem:[#allocation5 + $0x84] sm:$0xff]
    %v188 = vld [vmem:[#allocation5 + $0x8c] sm:$0xf]
    %v189 = vld [vmem:[#allocation5 + $0x90] sm:$0xff]
    %v190 = vld [vmem:[#allocation5 + $0x98] sm:$0xf]
    %v191 = vld [vmem:[#allocation5 + $0x9c] sm:$0xff]
    %v192 = vld [vmem:[#allocation5 + $0xa4] sm:$0xf]
    %v193 = vld [vmem:[#allocation5 + $0xa8] sm:$0xff]
    %v194 = vld [vmem:[#allocation5 + $0xb0] sm:$0xf]
    %v195 = vld [vmem:[#allocation5 + $0xb4] sm:$0xff]
    %v196 = vld [vmem:[#allocation5 + $0xbc] sm:$0xf]
    %v229 = vunpack.c.l.b16 %v165
    %v230 = vunpack.c.h.b16 %v165
    %v231 = vunpack.c.l.b16 %v166
    %v232 = vunpack.c.l.b16 %v167
    %v233 = vunpack.c.h.b16 %v167
    %v234 = vunpack.c.l.b16 %v168
    %v235 = vunpack.c.l.b16 %v169
    %v236 = vunpack.c.h.b16 %v169
    %v237 = vunpack.c.l.b16 %v170
    %v238 = vunpack.c.l.b16 %v171
    %v239 = vunpack.c.h.b16 %v171
    %v240 = vunpack.c.l.b16 %v172
    %v241 = vunpack.c.l.b16 %v173
    %v242 = vunpack.c.h.b16 %v173
    %v243 = vunpack.c.l.b16 %v174
    %v244 = vunpack.c.l.b16 %v175
    %v245 = vunpack.c.h.b16 %v175
    %v246 = vunpack.c.l.b16 %v176
    %v247 = vunpack.c.l.b16 %v177
    %v248 = vunpack.c.h.b16 %v177
    %v249 = vunpack.c.l.b16 %v178
    %v250 = vunpack.c.l.b16 %v179
    %v251 = vunpack.c.h.b16 %v179
    %v252 = vunpack.c.l.b16 %v180
    %v253 = vunpack.c.l.b16 %v181
    %v254 = vunpack.c.h.b16 %v181
    %v255 = vunpack.c.l.b16 %v182
    %v256 = vunpack.c.l.b16 %v183
    %v257 = vunpack.c.h.b16 %v183
    %v258 = vunpack.c.l.b16 %v184
    %v259 = vunpack.c.l.b16 %v185
    %v260 = vunpack.c.h.b16 %v185
    %v261 = vunpack.c.l.b16 %v186
    %v262 = vunpack.c.l.b16 %v187
    %v263 = vunpack.c.h.b16 %v187
    %v264 = vunpack.c.l.b16 %v188
    %v265 = vunpack.c.l.b16 %v189
    %v266 = vunpack.c.h.b16 %v189
    %v267 = vunpack.c.l.b16 %v190
    %v268 = vunpack.c.l.b16 %v191
    %v269 = vunpack.c.h.b16 %v191
    %v270 = vunpack.c.l.b16 %v192
    %v271 = vunpack.c.l.b16 %v193
    %v272 = vunpack.c.h.b16 %v193
    %v273 = vunpack.c.l.b16 %v194
    %v274 = vunpack.c.l.b16 %v195
    %v275 = vunpack.c.h.b16 %v195
    %v276 = vunpack.c.l.b16 %v196
    %v277 = vpack.c.b16 %v232, %v229
    %v278 = vpack.c.b16 %v233, %v230
    %v279 = vpack.c.b16 %v234, %v231
    %v280 = vpack.c.b16 %v238, %v235
    %v281 = vpack.c.b16 %v239, %v236
    %v282 = vpack.c.b16 %v240, %v237
    %v283 = vpack.c.b16 %v244, %v241
    %v284 = vpack.c.b16 %v245, %v242
    %v285 = vpack.c.b16 %v246, %v243
    %v286 = vpack.c.b16 %v250, %v247
    %v287 = vpack.c.b16 %v251, %v248
    %v288 = vpack.c.b16 %v252, %v249
    %v289 = vpack.c.b16 %v256, %v253
    %v290 = vpack.c.b16 %v257, %v254
    %v291 = vpack.c.b16 %v258, %v255
    %v292 = vpack.c.b16 %v262, %v259
    %v293 = vpack.c.b16 %v263, %v260
    %v294 = vpack.c.b16 %v264, %v261
    %v295 = vpack.c.b16 %v268, %v265
    %v296 = vpack.c.b16 %v269, %v266
    %v297 = vpack.c.b16 %v270, %v267
    %v298 = vpack.c.b16 %v274, %v271
    %v299 = vpack.c.b16 %v275, %v272
    %v300 = vpack.c.b16 %v276, %v273
    %325 = vmatprep.subr.bf16.mxu0 %v278
    %326 = vmatpush1.bf16.msra.mxu0 %v277
    %327 = vmatprep.subr.bf16.mxu0 %v281
    %328 = vmatpush1.bf16.msra.mxu0 %v280
    %329 = vmatprep.subr.bf16.mxu0 %v284
    %330 = vmatpush1.bf16.msra.mxu0 %v283
    %331 = vmatprep.subr.bf16.mxu0 %v287
    %332 = vmatpush1.bf16.msra.mxu0 %v286
    %333 = vmatprep.subr.bf16.mxu0 %v290
    %334 = vmatpush1.bf16.msra.mxu0 %v289
    %335 = vmatprep.subr.bf16.mxu0 %v293
    %336 = vmatpush1.bf16.msra.mxu0 %v292
    %337 = vmatprep.subr.bf16.mxu0 %v296
    %338 = vmatpush1.bf16.msra.mxu0 %v295
    %339 = vmatprep.subr.bf16.mxu0 %v299
    %340 = vmatpush1.bf16.msra.mxu0 %v298
    %341 = vmatprep.subr.bf16.mxu0 0
    %342 = vmatpush1.bf16.msra.mxu0 0
    %343 = vmatprep.subr.bf16.mxu0 0
    %344 = vmatpush1.bf16.msra.mxu0 0
    %345 = vmatprep.subr.bf16.mxu0 0
    %346 = vmatpush1.bf16.msra.mxu0 0
    %347 = vmatprep.subr.bf16.mxu0 0
    %348 = vmatpush1.bf16.msra.mxu0 0
    %349 = vmatprep.subr.bf16.mxu0 0
    %350 = vmatpush1.bf16.msra.mxu0 0
    %351 = vmatprep.subr.bf16.mxu0 0
    %352 = vmatpush1.bf16.msra.mxu0 0
    %353 = vmatprep.subr.bf16.mxu0 0
    %354 = vmatpush1.bf16.msra.mxu0 0
    %355 = vmatprep.subr.bf16.mxu0 0
    %356 = vmatpush1.bf16.msra.mxu0 0
    %357 = vmatprep.mubr.bf16.mxu0 0
    %358 = vmatmul.mubr.bf16.gmra.mrb[0].mxu0 %v163
    %v359 = vpop.f32.mrb[0].mxu0
    %v360 = vadd.f32 0.0, %v359
    %v361 = vpop.f32.mrb[0].mxu0
    %v362 = vadd.f32 0.0, %v361
    %v363 = vpop.f32.mrb[0].mxu0
    %v364 = vadd.f32 0.0, %v363
    %v365 = vpop.f32.mrb[0].mxu0
    %v366 = vadd.f32 0.0, %v365
    %367 = vmatprep.mubr.bf16.mxu0 0
    %368 = vmatmul.mubr.bf16.gmra.mrb[0].mxu0 %v164
    %v369 = vpop.f32.mrb[0].mxu0
    %v370 = vadd.f32 0.0, %v369
    %v371 = vpop.f32.mrb[0].mxu0
    %v372 = vadd.f32 0.0, %v371
    %v373 = vpop.f32.mrb[0].mxu0
    %v374 = vadd.f32 0.0, %v373
    %v375 = vpop.f32.mrb[0].mxu0
    %v376 = vadd.f32 0.0, %v375
    %377 = vdwg.mxu0
    %378 = vmatprep.subr.bf16.mxu0 0
    %379 = vmatpush1.bf16.msra.mxu0 %v279
    %380 = vmatprep.subr.bf16.mxu0 0
    %381 = vmatpush1.bf16.msra.mxu0 %v282
    %382 = vmatprep.subr.bf16.mxu0 0
    %383 = vmatpush1.bf16.msra.mxu0 %v285
    %384 = vmatprep.subr.bf16.mxu0 0
    %385 = vmatpush1.bf16.msra.mxu0 %v288
    %386 = vmatprep.subr.bf16.mxu0 0
    %387 = vmatpush1.bf16.msra.mxu0 %v291
    %388 = vmatprep.subr.bf16.mxu0 0
    %389 = vmatpush1.bf16.msra.mxu0 %v294
    %390 = vmatprep.subr.bf16.mxu0 0
    %391 = vmatpush1.bf16.msra.mxu0 %v297
    %392 = vmatprep.subr.bf16.mxu0 0
    %393 = vmatpush1.bf16.msra.mxu0 %v300
    %394 = vmatprep.subr.bf16.mxu0 0
    %395 = vmatpush1.bf16.msra.mxu0 0
    %396 = vmatprep.subr.bf16.mxu0 0
    %397 = vmatpush1.bf16.msra.mxu0 0
    %398 = vmatprep.subr.bf16.mxu0 0
    %399 = vmatpush1.bf16.msra.mxu0 0
    %400 = vmatprep.subr.bf16.mxu0 0
    %401 = vmatpush1.bf16.msra.mxu0 0
    %402 = vmatprep.subr.bf16.mxu0 0
    %403 = vmatpush1.bf16.msra.mxu0 0
    %404 = vmatprep.subr.bf16.mxu0 0
    %405 = vmatpush1.bf16.msra.mxu0 0
    %406 = vmatprep.subr.bf16.mxu0 0
    %407 = vmatpush1.bf16.msra.mxu0 0
    %408 = vmatprep.subr.bf16.mxu0 0
    %409 = vmatpush1.bf16.msra.mxu0 0
    %410 = vmatprep.mubr.bf16.mxu0 0
    %411 = vmatmul.mubr.bf16.gmra.mrb[0].mxu0 %v163
    %v412 = vpop.f32.mrb[0].mxu0
    %v413 = vadd.f32 0.0, %v412
    %v414 = vpop.f32.mrb[0].mxu0
    %v415 = vpop.f32.mrb[0].mxu0
    %v416 = vadd.f32 0.0, %v415
    %v417 = vpop.f32.mrb[0].mxu0
    %418 = vmatprep.mubr.bf16.mxu0 0
    %419 = vmatmul.mubr.bf16.gmra.mrb[0].mxu0 %v164
    %v420 = vpop.f32.mrb[0].mxu0
    %v421 = vadd.f32 0.0, %v420
    %v422 = vpop.f32.mrb[0].mxu0
    %v423 = vpop.f32.mrb[0].mxu0
    %v424 = vadd.f32 0.0, %v423
    %v425 = vpop.f32.mrb[0].mxu0
    %426 = vdwg.mxu0
    %v427 = vpack.c.bf16 %v364, %v360
    %v428 = vpack.c.bf16 %v366, %v362
    %v429 = vpack.c.bf16 %v416, %v413
    %v430 = vpack.c.bf16 %v374, %v370
    %v431 = vpack.c.bf16 %v376, %v372
    %v432 = vpack.c.bf16 %v424, %v421
    %435 = vrot.lane.b32.xlu0 %v427, 64
    %v436 = vpop.permute.xlu0 %435
    %437 = vrot.lane.b32.xlu0 %v430, 64
    %v438 = vpop.permute.xlu0 %437
    %441 = vrot.lane.b32.xlu0 %v428, 64
    %v442 = vpop.permute.xlu0 %441
    %443 = vrot.lane.b32.xlu0 %v431, 64
    %v444 = vpop.permute.xlu0 %443
    %447 = vrot.lane.b32.xlu0 %v429, 64
    %v448 = vpop.permute.xlu0 %447
    %449 = vrot.lane.b32.xlu0 %v432, 64
    %v450 = vpop.permute.xlu0 %449
    %vm453 = vcmask 523264
    %v455 = vsel %vm453, %v427, 0
    %v458 = vsel %vm453, %v428, 0
    %460 = vmatprep.subr.bf16.mxu0 0
    %461 = vmatpush1.bf16.xpose.msra.mxu0 %v458
    %462 = vmatprep.subr.bf16.mxu0 0
    %463 = vmatpush1.bf16.xpose.msra.mxu0 0
    %464 = vmatprep.subr.bf16.mxu0 0
    %465 = vmatpush1.bf16.xpose.msra.mxu0 0
    %466 = vmatprep.subr.bf16.mxu0 0
    %467 = vmatpush1.bf16.xpose.msra.mxu0 0
    %468 = vmatprep.subr.bf16.mxu0 0
    %469 = vmatpush1.bf16.xpose.msra.mxu0 0
    %470 = vmatprep.subr.bf16.mxu0 0
    %471 = vmatpush1.bf16.xpose.msra.mxu0 0
    %472 = vmatprep.subr.bf16.mxu0 0
    %473 = vmatpush1.bf16.xpose.msra.mxu0 0
    %474 = vmatprep.subr.bf16.mxu0 0
    %475 = vmatpush1.bf16.xpose.msra.mxu0 0
    %476 = vmatprep.subr.bf16.mxu0 0
    %477 = vmatpush1.bf16.xpose.msra.mxu0 0
    %478 = vmatprep.subr.bf16.mxu0 0
    %479 = vmatpush1.bf16.xpose.msra.mxu0 0
    %480 = vmatprep.subr.bf16.mxu0 0
    %481 = vmatpush1.bf16.xpose.msra.mxu0 0
    %482 = vmatprep.subr.bf16.mxu0 0
    %483 = vmatpush1.bf16.xpose.msra.mxu0 0
    %484 = vmatprep.subr.bf16.mxu0 0
    %485 = vmatpush1.bf16.xpose.msra.mxu0 0
    %486 = vmatprep.subr.bf16.mxu0 0
    %487 = vmatpush1.bf16.xpose.msra.mxu0 0
    %488 = vmatprep.subr.bf16.mxu0 0
    %489 = vmatpush1.bf16.xpose.msra.mxu0 0
    %490 = vmatprep.subr.bf16.mxu0 0
    %491 = vmatpush1.bf16.xpose.msra.mxu0 0
    %492 = vmatprep.mubr.bf16.mxu0 0
    %493 = vmatmul.mubr.bf16.gmra.mrb[0].mxu0 %v455
    %v494 = vpop.f32.mrb[0].mxu0
    %v495 = vadd.f32 0.0, %v494
    %v496 = vpop.f32.mrb[0].mxu0
    %v497 = vpop.f32.mrb[0].mxu0
    %v498 = vadd.f32 0.0, %v497
    %v499 = vpop.f32.mrb[0].mxu0
    %500 = vdwg.mxu0
    %v502 = vsel %vm453, %v430, 0
    %v505 = vsel %vm453, %v431, 0
    %507 = vmatprep.subr.bf16.mxu0 0
    %508 = vmatpush1.bf16.xpose.msra.mxu0 %v505
    %509 = vmatprep.subr.bf16.mxu0 0
    %510 = vmatpush1.bf16.xpose.msra.mxu0 0
    %511 = vmatprep.subr.bf16.mxu0 0
    %512 = vmatpush1.bf16.xpose.msra.mxu0 0
    %513 = vmatprep.subr.bf16.mxu0 0
    %514 = vmatpush1.bf16.xpose.msra.mxu0 0
    %515 = vmatprep.subr.bf16.mxu0 0
    %516 = vmatpush1.bf16.xpose.msra.mxu0 0
    %517 = vmatprep.subr.bf16.mxu0 0
    %518 = vmatpush1.bf16.xpose.msra.mxu0 0
    %519 = vmatprep.subr.bf16.mxu0 0
    %520 = vmatpush1.bf16.xpose.msra.mxu0 0
    %521 = vmatprep.subr.bf16.mxu0 0
    %522 = vmatpush1.bf16.xpose.msra.mxu0 0
    %523 = vmatprep.subr.bf16.mxu0 0
    %524 = vmatpush1.bf16.xpose.msra.mxu0 0
    %525 = vmatprep.subr.bf16.mxu0 0
    %526 = vmatpush1.bf16.xpose.msra.mxu0 0
    %527 = vmatprep.subr.bf16.mxu0 0
    %528 = vmatpush1.bf16.xpose.msra.mxu0 0
    %529 = vmatprep.subr.bf16.mxu0 0
    %530 = vmatpush1.bf16.xpose.msra.mxu0 0
    %531 = vmatprep.subr.bf16.mxu0 0
    %532 = vmatpush1.bf16.xpose.msra.mxu0 0
    %533 = vmatprep.subr.bf16.mxu0 0
    %534 = vmatpush1.bf16.xpose.msra.mxu0 0
    %535 = vmatprep.subr.bf16.mxu0 0
    %536 = vmatpush1.bf16.xpose.msra.mxu0 0
    %537 = vmatprep.subr.bf16.mxu0 0
    %538 = vmatpush1.bf16.xpose.msra.mxu0 0
    %539 = vmatprep.mubr.bf16.mxu0 0
    %540 = vmatmul.mubr.bf16.gmra.mrb[0].mxu0 %v502
    %v541 = vpop.f32.mrb[0].mxu0
    %v542 = vadd.f32 0.0, %v541
    %v543 = vpop.f32.mrb[0].mxu0
    %v544 = vpop.f32.mrb[0].mxu0
    %v545 = vadd.f32 0.0, %v544
    %v546 = vpop.f32.mrb[0].mxu0
    %547 = vdwg.mxu0
    %v549 = vsel %vm453, %v436, 0
    %v552 = vsel %vm453, %v442, 0
    %554 = vmatprep.subr.bf16.mxu0 0
    %555 = vmatpush1.bf16.xpose.msra.mxu0 %v552
    %556 = vmatprep.subr.bf16.mxu0 0
    %557 = vmatpush1.bf16.xpose.msra.mxu0 0
    %558 = vmatprep.subr.bf16.mxu0 0
    %559 = vmatpush1.bf16.xpose.msra.mxu0 0
    %560 = vmatprep.subr.bf16.mxu0 0
    %561 = vmatpush1.bf16.xpose.msra.mxu0 0
    %562 = vmatprep.subr.bf16.mxu0 0
    %563 = vmatpush1.bf16.xpose.msra.mxu0 0
    %564 = vmatprep.subr.bf16.mxu0 0
    %565 = vmatpush1.bf16.xpose.msra.mxu0 0
    %566 = vmatprep.subr.bf16.mxu0 0
    %567 = vmatpush1.bf16.xpose.msra.mxu0 0
    %568 = vmatprep.subr.bf16.mxu0 0
    %569 = vmatpush1.bf16.xpose.msra.mxu0 0
    %570 = vmatprep.subr.bf16.mxu0 0
    %571 = vmatpush1.bf16.xpose.msra.mxu0 0
    %572 = vmatprep.subr.bf16.mxu0 0
    %573 = vmatpush1.bf16.xpose.msra.mxu0 0
    %574 = vmatprep.subr.bf16.mxu0 0
    %575 = vmatpush1.bf16.xpose.msra.mxu0 0
    %576 = vmatprep.subr.bf16.mxu0 0
    %577 = vmatpush1.bf16.xpose.msra.mxu0 0
    %578 = vmatprep.subr.bf16.mxu0 0
    %579 = vmatpush1.bf16.xpose.msra.mxu0 0
    %580 = vmatprep.subr.bf16.mxu0 0
    %581 = vmatpush1.bf16.xpose.msra.mxu0 0
    %582 = vmatprep.subr.bf16.mxu0 0
    %583 = vmatpush1.bf16.xpose.msra.mxu0 0
    %584 = vmatprep.subr.bf16.mxu0 0
    %585 = vmatpush1.bf16.xpose.msra.mxu0 0
    %586 = vmatprep.mubr.bf16.mxu0 0
    %587 = vmatmul.mubr.bf16.gmra.mrb[0].mxu0 %v549
    %v588 = vpop.f32.mrb[0].mxu0
    %v589 = vadd.f32 0.0, %v588
    %v590 = vpop.f32.mrb[0].mxu0
    %v591 = vpop.f32.mrb[0].mxu0
    %v592 = vadd.f32 0.0, %v591
    %v593 = vpop.f32.mrb[0].mxu0
    %594 = vdwg.mxu0
    %v596 = vsel %vm453, %v438, 0
    %v599 = vsel %vm453, %v444, 0
    %601 = vmatprep.subr.bf16.mxu0 0
    %602 = vmatpush1.bf16.xpose.msra.mxu0 %v599
    %603 = vmatprep.subr.bf16.mxu0 0
    %604 = vmatpush1.bf16.xpose.msra.mxu0 0
    %605 = vmatprep.subr.bf16.mxu0 0
    %606 = vmatpush1.bf16.xpose.msra.mxu0 0
    %607 = vmatprep.subr.bf16.mxu0 0
    %608 = vmatpush1.bf16.xpose.msra.mxu0 0
    %609 = vmatprep.subr.bf16.mxu0 0
    %610 = vmatpush1.bf16.xpose.msra.mxu0 0
    %611 = vmatprep.subr.bf16.mxu0 0
    %612 = vmatpush1.bf16.xpose.msra.mxu0 0
    %613 = vmatprep.subr.bf16.mxu0 0
    %614 = vmatpush1.bf16.xpose.msra.mxu0 0
    %615 = vmatprep.subr.bf16.mxu0 0
    %616 = vmatpush1.bf16.xpose.msra.mxu0 0
    %617 = vmatprep.subr.bf16.mxu0 0
    %618 = vmatpush1.bf16.xpose.msra.mxu0 0
    %619 = vmatprep.subr.bf16.mxu0 0
    %620 = vmatpush1.bf16.xpose.msra.mxu0 0
    %621 = vmatprep.subr.bf16.mxu0 0
    %622 = vmatpush1.bf16.xpose.msra.mxu0 0
    %623 = vmatprep.subr.bf16.mxu0 0
    %624 = vmatpush1.bf16.xpose.msra.mxu0 0
    %625 = vmatprep.subr.bf16.mxu0 0
    %626 = vmatpush1.bf16.xpose.msra.mxu0 0
    %627 = vmatprep.subr.bf16.mxu0 0
    %628 = vmatpush1.bf16.xpose.msra.mxu0 0
    %629 = vmatprep.subr.bf16.mxu0 0
    %630 = vmatpush1.bf16.xpose.msra.mxu0 0
    %631 = vmatprep.subr.bf16.mxu0 0
    %632 = vmatpush1.bf16.xpose.msra.mxu0 0
    %633 = vmatprep.mubr.bf16.mxu0 0
    %634 = vmatmul.mubr.bf16.gmra.mrb[0].mxu0 %v596
    %v635 = vpop.f32.mrb[0].mxu0
    %v636 = vadd.f32 0.0, %v635
    %v637 = vpop.f32.mrb[0].mxu0
    %v638 = vpop.f32.mrb[0].mxu0
    %v639 = vadd.f32 0.0, %v638
    %v640 = vpop.f32.mrb[0].mxu0
    %641 = vdwg.mxu0
    %vm642 = vcmask 130048
    %v643 = vsel %vm642, %v495, -inf
    %644 = vmax.xlane.f32.xlu0 %v643
    %v645 = vpop.xlane.xlu0 %644
    %v646 = vsel %vm642, %v498, -inf
    %647 = vmax.xlane.f32.xlu0 %v646
    %v648 = vpop.xlane.xlu0 %647
    %v649 = vsel %vm642, %v542, -inf
    %650 = vmax.xlane.f32.xlu0 %v649
    %v651 = vpop.xlane.xlu0 %650
    %v652 = vsel %vm642, %v545, -inf
    %653 = vmax.xlane.f32.xlu0 %v652
    %v654 = vpop.xlane.xlu0 %653
    %v655 = vsel %vm642, %v589, -inf
    %656 = vmax.xlane.f32.xlu0 %v655
    %v657 = vpop.xlane.xlu0 %656
    %v658 = vsel %vm642, %v592, -inf
    %659 = vmax.xlane.f32.xlu0 %v658
    %v660 = vpop.xlane.xlu0 %659
    %v661 = vsel %vm642, %v636, -inf
    %662 = vmax.xlane.f32.xlu0 %v661
    %v663 = vpop.xlane.xlu0 %662
    %v664 = vsel %vm642, %v639, -inf
    %665 = vmax.xlane.f32.xlu0 %v664
    %v666 = vpop.xlane.xlu0 %665
    %v667 = vsub.f32 %v495, %v645
    %v668 = vsub.f32 %v498, %v648
    %v669 = vsub.f32 %v542, %v651
    %v670 = vsub.f32 %v545, %v654
    %v671 = vsub.f32 %v589, %v657
    %v672 = vsub.f32 %v592, %v660
    %v673 = vsub.f32 %v636, %v663
    %v674 = vsub.f32 %v639, %v666
    %v675 = vmul.f32 %v667, 1.442695
    %v676 = vpow.pop %v675
    %v677 = vmul.f32 %v668, 1.442695
    %v678 = vpow.pop %v677
    %v679 = vmul.f32 %v669, 1.442695
    %v680 = vpow.pop %v679
    %v681 = vmul.f32 %v670, 1.442695
    %v682 = vpow.pop %v681
    %v683 = vmul.f32 %v671, 1.442695
    %v684 = vpow.pop %v683
    %v685 = vmul.f32 %v672, 1.442695
    %v686 = vpow.pop %v685
    %v687 = vmul.f32 %v673, 1.442695
    %v688 = vpow.pop %v687
    %v689 = vmul.f32 %v674, 1.442695
    %v690 = vpow.pop %v689
    %v691 = vsel %vm642, %v676, 0.0
    %692 = vadd.xlane.f32.xlu0 %v691
    %v693 = vpop.xlane.xlu0 %692
    %v694 = vsel %vm642, %v678, 0.0
    %695 = vadd.xlane.f32.xlu0 %v694
    %v696 = vpop.xlane.xlu0 %695
    %v697 = vsel %vm642, %v680, 0.0
    %698 = vadd.xlane.f32.xlu0 %v697
    %v699 = vpop.xlane.xlu0 %698
    %v700 = vsel %vm642, %v682, 0.0
    %701 = vadd.xlane.f32.xlu0 %v700
    %v702 = vpop.xlane.xlu0 %701
    %v703 = vsel %vm642, %v684, 0.0
    %704 = vadd.xlane.f32.xlu0 %v703
    %v705 = vpop.xlane.xlu0 %704
    %v706 = vsel %vm642, %v686, 0.0
    %707 = vadd.xlane.f32.xlu0 %v706
    %v708 = vpop.xlane.xlu0 %707
    %v709 = vsel %vm642, %v688, 0.0
    %710 = vadd.xlane.f32.xlu0 %v709
    %v711 = vpop.xlane.xlu0 %710
    %v712 = vsel %vm642, %v690, 0.0
    %713 = vadd.xlane.f32.xlu0 %v712
    %v714 = vpop.xlane.xlu0 %713
    %v715 = vrcp.pop %v693
    %v716 = vrcp.pop %v696
    %v717 = vrcp.pop %v699
    %v718 = vrcp.pop %v702
    %v719 = vrcp.pop %v705
    %v720 = vrcp.pop %v708
    %v721 = vrcp.pop %v711
    %v722 = vrcp.pop %v714
    %v723 = vmul.f32 %v676, %v715
    %v724 = vmul.f32 %v678, %v716
    %v725 = vmul.f32 %v680, %v717
    %v726 = vmul.f32 %v682, %v718
    %v727 = vmul.f32 %v684, %v719
    %v728 = vmul.f32 %v686, %v720
    %v729 = vmul.f32 %v688, %v721
    %v730 = vmul.f32 %v690, %v722
    %v731 = vpack.c.bf16 %v724, %v723
    %v732 = vpack.c.bf16 %v726, %v725
    %v733 = vpack.c.bf16 %v728, %v727
    %v734 = vpack.c.bf16 %v730, %v729
    %v736 = vsel %vm642, %v731, 0
    %738 = vmatprep.subr.bf16.mxu0 0
    %739 = vmatpush1.bf16.msra.mxu0 %v429
    %740 = vmatprep.subr.bf16.mxu0 0
    %741 = vmatpush1.bf16.msra.mxu0 0
    %742 = vmatprep.subr.bf16.mxu0 0
    %743 = vmatpush1.bf16.msra.mxu0 0
    %744 = vmatprep.subr.bf16.mxu0 0
    %745 = vmatpush1.bf16.msra.mxu0 0
    %746 = vmatprep.subr.bf16.mxu0 0
    %747 = vmatpush1.bf16.msra.mxu0 0
    %748 = vmatprep.subr.bf16.mxu0 0
    %749 = vmatpush1.bf16.msra.mxu0 0
    %750 = vmatprep.subr.bf16.mxu0 0
    %751 = vmatpush1.bf16.msra.mxu0 0
    %752 = vmatprep.subr.bf16.mxu0 0
    %753 = vmatpush1.bf16.msra.mxu0 0
    %754 = vmatprep.subr.bf16.mxu0 0
    %755 = vmatpush1.bf16.msra.mxu0 0
    %756 = vmatprep.subr.bf16.mxu0 0
    %757 = vmatpush1.bf16.msra.mxu0 0
    %758 = vmatprep.subr.bf16.mxu0 0
    %759 = vmatpush1.bf16.msra.mxu0 0
    %760 = vmatprep.subr.bf16.mxu0 0
    %761 = vmatpush1.bf16.msra.mxu0 0
    %762 = vmatprep.subr.bf16.mxu0 0
    %763 = vmatpush1.bf16.msra.mxu0 0
    %764 = vmatprep.subr.bf16.mxu0 0
    %765 = vmatpush1.bf16.msra.mxu0 0
    %766 = vmatprep.subr.bf16.mxu0 0
    %767 = vmatpush1.bf16.msra.mxu0 0
    %768 = vmatprep.subr.bf16.mxu0 0
    %769 = vmatpush1.bf16.msra.mxu0 0
    %770 = vmatprep.mubr.bf16.mxu0 0
    %771 = vmatmul.mubr.bf16.gmra.mrb[0].mxu0 %v736
    %v772 = vpop.f32.mrb[0].mxu0
    %v773 = vadd.f32 0.0, %v772
    %v774 = vpop.f32.mrb[0].mxu0
    %v775 = vpop.f32.mrb[0].mxu0
    %v776 = vadd.f32 0.0, %v775
    %v777 = vpop.f32.mrb[0].mxu0
    %778 = vdwg.mxu0
    %v780 = vsel %vm642, %v732, 0
    %782 = vmatprep.subr.bf16.mxu0 0
    %783 = vmatpush1.bf16.msra.mxu0 %v432
    %784 = vmatprep.subr.bf16.mxu0 0
    %785 = vmatpush1.bf16.msra.mxu0 0
    %786 = vmatprep.subr.bf16.mxu0 0
    %787 = vmatpush1.bf16.msra.mxu0 0
    %788 = vmatprep.subr.bf16.mxu0 0
    %789 = vmatpush1.bf16.msra.mxu0 0
    %790 = vmatprep.subr.bf16.mxu0 0
    %791 = vmatpush1.bf16.msra.mxu0 0
    %792 = vmatprep.subr.bf16.mxu0 0
    %793 = vmatpush1.bf16.msra.mxu0 0
    %794 = vmatprep.subr.bf16.mxu0 0
    %795 = vmatpush1.bf16.msra.mxu0 0
    %796 = vmatprep.subr.bf16.mxu0 0
    %797 = vmatpush1.bf16.msra.mxu0 0
    %798 = vmatprep.subr.bf16.mxu0 0
    %799 = vmatpush1.bf16.msra.mxu0 0
    %800 = vmatprep.subr.bf16.mxu0 0
    %801 = vmatpush1.bf16.msra.mxu0 0
    %802 = vmatprep.subr.bf16.mxu0 0
    %803 = vmatpush1.bf16.msra.mxu0 0
    %804 = vmatprep.subr.bf16.mxu0 0
    %805 = vmatpush1.bf16.msra.mxu0 0
    %806 = vmatprep.subr.bf16.mxu0 0
    %807 = vmatpush1.bf16.msra.mxu0 0
    %808 = vmatprep.subr.bf16.mxu0 0
    %809 = vmatpush1.bf16.msra.mxu0 0
    %810 = vmatprep.subr.bf16.mxu0 0
    %811 = vmatpush1.bf16.msra.mxu0 0
    %812 = vmatprep.subr.bf16.mxu0 0
    %813 = vmatpush1.bf16.msra.mxu0 0
    %814 = vmatprep.mubr.bf16.mxu0 0
    %815 = vmatmul.mubr.bf16.gmra.mrb[0].mxu0 %v780
    %v816 = vpop.f32.mrb[0].mxu0
    %v817 = vadd.f32 0.0, %v816
    %v818 = vpop.f32.mrb[0].mxu0
    %v819 = vpop.f32.mrb[0].mxu0
    %v820 = vadd.f32 0.0, %v819
    %v821 = vpop.f32.mrb[0].mxu0
    %822 = vdwg.mxu0
    %v824 = vsel %vm642, %v733, 0
    %826 = vmatprep.subr.bf16.mxu0 0
    %827 = vmatpush1.bf16.msra.mxu0 %v448
    %828 = vmatprep.subr.bf16.mxu0 0
    %829 = vmatpush1.bf16.msra.mxu0 0
    %830 = vmatprep.subr.bf16.mxu0 0
    %831 = vmatpush1.bf16.msra.mxu0 0
    %832 = vmatprep.subr.bf16.mxu0 0
    %833 = vmatpush1.bf16.msra.mxu0 0
    %834 = vmatprep.subr.bf16.mxu0 0
    %835 = vmatpush1.bf16.msra.mxu0 0
    %836 = vmatprep.subr.bf16.mxu0 0
    %837 = vmatpush1.bf16.msra.mxu0 0
    %838 = vmatprep.subr.bf16.mxu0 0
    %839 = vmatpush1.bf16.msra.mxu0 0
    %840 = vmatprep.subr.bf16.mxu0 0
    %841 = vmatpush1.bf16.msra.mxu0 0
    %842 = vmatprep.subr.bf16.mxu0 0
    %843 = vmatpush1.bf16.msra.mxu0 0
    %844 = vmatprep.subr.bf16.mxu0 0
    %845 = vmatpush1.bf16.msra.mxu0 0
    %846 = vmatprep.subr.bf16.mxu0 0
    %847 = vmatpush1.bf16.msra.mxu0 0
    %848 = vmatprep.subr.bf16.mxu0 0
    %849 = vmatpush1.bf16.msra.mxu0 0
    %850 = vmatprep.subr.bf16.mxu0 0
    %851 = vmatpush1.bf16.msra.mxu0 0
    %852 = vmatprep.subr.bf16.mxu0 0
    %853 = vmatpush1.bf16.msra.mxu0 0
    %854 = vmatprep.subr.bf16.mxu0 0
    %855 = vmatpush1.bf16.msra.mxu0 0
    %856 = vmatprep.subr.bf16.mxu0 0
    %857 = vmatpush1.bf16.msra.mxu0 0
    %858 = vmatprep.mubr.bf16.mxu0 0
    %859 = vmatmul.mubr.bf16.gmra.mrb[0].mxu0 %v824
    %v860 = vpop.f32.mrb[0].mxu0
    %v861 = vadd.f32 0.0, %v860
    %v862 = vpop.f32.mrb[0].mxu0
    %v863 = vpop.f32.mrb[0].mxu0
    %v864 = vadd.f32 0.0, %v863
    %v865 = vpop.f32.mrb[0].mxu0
    %866 = vdwg.mxu0
    %v868 = vsel %vm642, %v734, 0
    %870 = vmatprep.subr.bf16.mxu0 0
    %871 = vmatpush1.bf16.msra.mxu0 %v450
    %872 = vmatprep.subr.bf16.mxu0 0
    %873 = vmatpush1.bf16.msra.mxu0 0
    %874 = vmatprep.subr.bf16.mxu0 0
    %875 = vmatpush1.bf16.msra.mxu0 0
    %876 = vmatprep.subr.bf16.mxu0 0
    %877 = vmatpush1.bf16.msra.mxu0 0
    %878 = vmatprep.subr.bf16.mxu0 0
    %879 = vmatpush1.bf16.msra.mxu0 0
    %880 = vmatprep.subr.bf16.mxu0 0
    %881 = vmatpush1.bf16.msra.mxu0 0
    %882 = vmatprep.subr.bf16.mxu0 0
    %883 = vmatpush1.bf16.msra.mxu0 0
    %884 = vmatprep.subr.bf16.mxu0 0
    %885 = vmatpush1.bf16.msra.mxu0 0
    %886 = vmatprep.subr.bf16.mxu0 0
    %887 = vmatpush1.bf16.msra.mxu0 0
    %888 = vmatprep.subr.bf16.mxu0 0
    %889 = vmatpush1.bf16.msra.mxu0 0
    %890 = vmatprep.subr.bf16.mxu0 0
    %891 = vmatpush1.bf16.msra.mxu0 0
    %892 = vmatprep.subr.bf16.mxu0 0
    %893 = vmatpush1.bf16.msra.mxu0 0
    %894 = vmatprep.subr.bf16.mxu0 0
    %895 = vmatpush1.bf16.msra.mxu0 0
    %896 = vmatprep.subr.bf16.mxu0 0
    %897 = vmatpush1.bf16.msra.mxu0 0
    %898 = vmatprep.subr.bf16.mxu0 0
    %899 = vmatpush1.bf16.msra.mxu0 0
    %900 = vmatprep.subr.bf16.mxu0 0
    %901 = vmatpush1.bf16.msra.mxu0 0
    %902 = vmatprep.mubr.bf16.mxu0 0
    %903 = vmatmul.mubr.bf16.gmra.mrb[0].mxu0 %v868
    %v904 = vpop.f32.mrb[0].mxu0
    %v905 = vadd.f32 0.0, %v904
    %v906 = vpop.f32.mrb[0].mxu0
    %v907 = vpop.f32.mrb[0].mxu0
    %v908 = vadd.f32 0.0, %v907
    %v909 = vpop.f32.mrb[0].mxu0
    %910 = vdwg.mxu0
    %v911 = vpack.c.bf16 %v776, %v773
    %v912 = vpack.c.bf16 %v820, %v817
    %v913 = vpack.c.bf16 %v864, %v861
    %v914 = vpack.c.bf16 %v908, %v905
    %v915 = vld [vmem:[#allocation7] sm:$0xf]
    %v916 = vld [vmem:[#allocation7 + $0x4] sm:$0xf]
    %v917 = vld [vmem:[#allocation7 + $0x8] sm:$0xf]
    %v918 = vld [vmem:[#allocation7 + $0xc] sm:$0xf]
    %v919 = vld [vmem:[#allocation7 + $0x10] sm:$0xf]
    %v920 = vld [vmem:[#allocation7 + $0x14] sm:$0xf]
    %v921 = vld [vmem:[#allocation7 + $0x18] sm:$0xf]
    %v922 = vld [vmem:[#allocation7 + $0x1c] sm:$0xf]
    %v923 = vld [vmem:[#allocation7 + $0x20] sm:$0xf]
    %v924 = vld [vmem:[#allocation7 + $0x24] sm:$0xf]
    %v925 = vld [vmem:[#allocation7 + $0x28] sm:$0xf]
    %v926 = vld [vmem:[#allocation7 + $0x2c] sm:$0xf]
    %v927 = vld [vmem:[#allocation7 + $0x30] sm:$0xf]
    %v928 = vld [vmem:[#allocation7 + $0x34] sm:$0xf]
    %v929 = vld [vmem:[#allocation7 + $0x38] sm:$0xf]
    %v930 = vld [vmem:[#allocation7 + $0x3c] sm:$0xf]
    %v939 = vunpack.c.l.b16 %v915
    %v940 = vunpack.c.l.b16 %v916
    %v941 = vunpack.c.l.b16 %v917
    %v942 = vunpack.c.l.b16 %v918
    %v943 = vunpack.c.l.b16 %v919
    %v944 = vunpack.c.l.b16 %v920
    %v945 = vunpack.c.l.b16 %v921
    %v946 = vunpack.c.l.b16 %v922
    %v947 = vpack.c.b16 %v940, %v939
    %v948 = vpack.c.b16 %v942, %v941
    %v949 = vpack.c.b16 %v944, %v943
    %v950 = vpack.c.b16 %v946, %v945
    %v956 = vsel %vm453, %v911, 0
    %v959 = vsel %vm453, %v912, 0
    %961 = vmatprep.subr.bf16.mxu0 0
    %962 = vmatpush1.bf16.msra.mxu0 %v947
    %963 = vmatprep.subr.bf16.mxu0 0
    %964 = vmatpush1.bf16.msra.mxu0 %v948
    %965 = vmatprep.subr.bf16.mxu0 0
    %966 = vmatpush1.bf16.msra.mxu0 %v949
    %967 = vmatprep.subr.bf16.mxu0 0
    %968 = vmatpush1.bf16.msra.mxu0 %v950
    %969 = vmatprep.subr.bf16.mxu0 0
    %970 = vmatpush1.bf16.msra.mxu0 0
    %971 = vmatprep.subr.bf16.mxu0 0
    %972 = vmatpush1.bf16.msra.mxu0 0
    %973 = vmatprep.subr.bf16.mxu0 0
    %974 = vmatpush1.bf16.msra.mxu0 0
    %975 = vmatprep.subr.bf16.mxu0 0
    %976 = vmatpush1.bf16.msra.mxu0 0
    %977 = vmatprep.subr.bf16.mxu0 0
    %978 = vmatpush1.bf16.msra.mxu0 0
    %979 = vmatprep.subr.bf16.mxu0 0
    %980 = vmatpush1.bf16.msra.mxu0 0
    %981 = vmatprep.subr.bf16.mxu0 0
    %982 = vmatpush1.bf16.msra.mxu0 0
    %983 = vmatprep.subr.bf16.mxu0 0
    %984 = vmatpush1.bf16.msra.mxu0 0
    %985 = vmatprep.subr.bf16.mxu0 0
    %986 = vmatpush1.bf16.msra.mxu0 0
    %987 = vmatprep.subr.bf16.mxu0 0
    %988 = vmatpush1.bf16.msra.mxu0 0
    %989 = vmatprep.subr.bf16.mxu0 0
    %990 = vmatpush1.bf16.msra.mxu0 0
    %991 = vmatprep.subr.bf16.mxu0 0
    %992 = vmatpush1.bf16.msra.mxu0 0
    %993 = vmatprep.mubr.bf16.mxu0 0
    %994 = vmatmul.mubr.bf16.gmra.mrb[0].mxu0 %v956
    %v995 = vpop.f32.mrb[0].mxu0
    %v996 = vadd.f32 0.0, %v995
    %v997 = vpop.f32.mrb[0].mxu0
    %v998 = vpop.f32.mrb[0].mxu0
    %v999 = vadd.f32 0.0, %v998
    %v1000 = vpop.f32.mrb[0].mxu0
    %1001 = vmatprep.mubr.bf16.mxu0 0
    %1002 = vmatmul.mubr.bf16.gmra.mrb[0].mxu0 %v959
    %v1003 = vpop.f32.mrb[0].mxu0
    %v1004 = vadd.f32 0.0, %v1003
    %v1005 = vpop.f32.mrb[0].mxu0
    %v1006 = vpop.f32.mrb[0].mxu0
    %v1007 = vadd.f32 0.0, %v1006
    %v1008 = vpop.f32.mrb[0].mxu0
    %1009 = vdwg.mxu0
    %v1018 = vunpack.c.l.b16 %v923
    %v1019 = vunpack.c.l.b16 %v924
    %v1020 = vunpack.c.l.b16 %v925
    %v1021 = vunpack.c.l.b16 %v926
    %v1022 = vunpack.c.l.b16 %v927
    %v1023 = vunpack.c.l.b16 %v928
    %v1024 = vunpack.c.l.b16 %v929
    %v1025 = vunpack.c.l.b16 %v930
    %v1026 = vpack.c.b16 %v1019, %v1018
    %v1027 = vpack.c.b16 %v1021, %v1020
    %v1028 = vpack.c.b16 %v1023, %v1022
    %v1029 = vpack.c.b16 %v1025, %v1024
    %v1035 = vsel %vm453, %v913, 0
    %v1038 = vsel %vm453, %v914, 0
    %1040 = vmatprep.subr.bf16.mxu0 0
    %1041 = vmatpush1.bf16.msra.mxu0 %v1026
    %1042 = vmatprep.subr.bf16.mxu0 0
    %1043 = vmatpush1.bf16.msra.mxu0 %v1027
    %1044 = vmatprep.subr.bf16.mxu0 0
    %1045 = vmatpush1.bf16.msra.mxu0 %v1028
    %1046 = vmatprep.subr.bf16.mxu0 0
    %1047 = vmatpush1.bf16.msra.mxu0 %v1029
    %1048 = vmatprep.subr.bf16.mxu0 0
    %1049 = vmatpush1.bf16.msra.mxu0 0
    %1050 = vmatprep.subr.bf16.mxu0 0
    %1051 = vmatpush1.bf16.msra.mxu0 0
    %1052 = vmatprep.subr.bf16.mxu0 0
    %1053 = vmatpush1.bf16.msra.mxu0 0
    %1054 = vmatprep.subr.bf16.mxu0 0
    %1055 = vmatpush1.bf16.msra.mxu0 0
    %1056 = vmatprep.subr.bf16.mxu0 0
    %1057 = vmatpush1.bf16.msra.mxu0 0
    %1058 = vmatprep.subr.bf16.mxu0 0
    %1059 = vmatpush1.bf16.msra.mxu0 0
    %1060 = vmatprep.subr.bf16.mxu0 0
    %1061 = vmatpush1.bf16.msra.mxu0 0
    %1062 = vmatprep.subr.bf16.mxu0 0
    %1063 = vmatpush1.bf16.msra.mxu0 0
    %1064 = vmatprep.subr.bf16.mxu0 0
    %1065 = vmatpush1.bf16.msra.mxu0 0
    %1066 = vmatprep.subr.bf16.mxu0 0
    %1067 = vmatpush1.bf16.msra.mxu0 0
    %1068 = vmatprep.subr.bf16.mxu0 0
    %1069 = vmatpush1.bf16.msra.mxu0 0
    %1070 = vmatprep.subr.bf16.mxu0 0
    %1071 = vmatpush1.bf16.msra.mxu0 0
    %1072 = vmatprep.mubr.bf16.mxu0 0
    %1073 = vmatmul.mubr.bf16.gmra.mrb[0].mxu0 %v1035
    %v1074 = vpop.f32.mrb[0].mxu0
    %v1075 = vadd.f32 0.0, %v1074
    %v1076 = vpop.f32.mrb[0].mxu0
    %v1077 = vpop.f32.mrb[0].mxu0
    %v1078 = vadd.f32 0.0, %v1077
    %v1079 = vpop.f32.mrb[0].mxu0
    %1080 = vmatprep.mubr.bf16.mxu0 0
    %1081 = vmatmul.mubr.bf16.gmra.mrb[0].mxu0 %v1038
    %v1082 = vpop.f32.mrb[0].mxu0
    %v1083 = vadd.f32 0.0, %v1082
    %v1084 = vpop.f32.mrb[0].mxu0
    %v1085 = vpop.f32.mrb[0].mxu0
    %v1086 = vadd.f32 0.0, %v1085
    %v1087 = vpop.f32.mrb[0].mxu0
    %1088 = vdwg.mxu0
    %v1089 = vadd.f32 %v996, %v1075
    %v1090 = vadd.f32 %v999, %v1078
    %v1091 = vadd.f32 %v1004, %v1083
    %v1092 = vadd.f32 %v1007, %v1086
    %v1093 = vadd.f32 %v96, %v1089
    %v1094 = vadd.f32 %v97, %v1090
    %v1095 = vadd.f32 %v98, %v1091
    %v1096 = vadd.f32 %v99, %v1092
    %v1097 = vld [vmem:[%s4] sm:$0x1]
    %1098 = vadd.xlane.f32.xlu0 %v1093
    %v1099 = vpop.xlane.xlu0 %1098
    %1100 = vadd.xlane.f32.xlu0 %v1094
    %v1101 = vpop.xlane.xlu0 %1100
    %1102 = vadd.xlane.f32.xlu0 %v1095
    %v1103 = vpop.xlane.xlu0 %1102
    %1104 = vadd.xlane.f32.xlu0 %v1096
    %v1105 = vpop.xlane.xlu0 %1104
    %v1106 = vmul.f32 %v1093, %v1093
    %v1107 = vmul.f32 %v1094, %v1094
    %v1108 = vmul.f32 %v1095, %v1095
    %v1109 = vmul.f32 %v1096, %v1096
    %1110 = vadd.xlane.f32.xlu0 %v1106
    %v1111 = vpop.xlane.xlu0 %1110
    %1112 = vadd.xlane.f32.xlu0 %v1107
    %v1113 = vpop.xlane.xlu0 %1112
    %1114 = vadd.xlane.f32.xlu0 %v1108
    %v1115 = vpop.xlane.xlu0 %1114
    %1116 = vadd.xlane.f32.xlu0 %v1109
    %v1117 = vpop.xlane.xlu0 %1116
    %v1118 = vmul.f32 %v1099, 0.0078125
    %v1119 = vmul.f32 %v1101, 0.0078125
    %v1120 = vmul.f32 %v1103, 0.0078125
    %v1121 = vmul.f32 %v1105, 0.0078125
    %v1122 = vmul.f32 %v1111, 0.0078125
    %v1123 = vmul.f32 %v1113, 0.0078125
    %v1124 = vmul.f32 %v1115, 0.0078125
    %v1125 = vmul.f32 %v1117, 0.0078125
    %v1126 = vmul.f32 %v1118, %v1118
    %v1127 = vmul.f32 %v1119, %v1119
    %v1128 = vmul.f32 %v1120, %v1120
    %v1129 = vmul.f32 %v1121, %v1121
    %v1130 = vsub.f32 %v1122, %v1126
    %v1131 = vsub.f32 %v1123, %v1127
    %v1132 = vsub.f32 %v1124, %v1128
    %v1133 = vsub.f32 %v1125, %v1129
    %v1134 = vsub.f32 %v1093, %v1118
    %v1135 = vsub.f32 %v1094, %v1119
    %v1136 = vsub.f32 %v1095, %v1120
    %v1137 = vsub.f32 %v1096, %v1121
    %v1138 = vadd.f32 %v1130, 1e-05
    %v1139 = vadd.f32 %v1131, 1e-05
    %v1140 = vadd.f32 %v1132, 1e-05
    %v1141 = vadd.f32 %v1133, 1e-05
    %v1142 = vrsqrt.pop %v1138
    %v1143 = vrsqrt.pop %v1139
    %v1144 = vrsqrt.pop %v1140
    %v1145 = vrsqrt.pop %v1141
    %v1146 = vmul.f32 %v1134, %v1142
    %v1147 = vmul.f32 %v1135, %v1143
    %v1148 = vmul.f32 %v1136, %v1144
    %v1149 = vmul.f32 %v1137, %v1145
    %v1151 = vlaneseq
    %v1152 = vshrl.u32 %v1151, 7
    %v1153 = vsub.s32 0, %v1152
    %v1154 = vrot.slane %v1097, %v1153
    %v1156 = vmul.f32 %v1146, %v1154
    %v1157 = vmul.f32 %v1147, %v1154
    %v1158 = vmul.f32 %v1148, %v1154
    %v1159 = vmul.f32 %v1149, %v1154
    %v1160 = vpack.c.bf16 %v1157, %v1156
    %v1161 = vpack.c.bf16 %v1159, %v1158
    %v1162 = vld [vmem:[#allocation8] sm:$0xff]
    %v1163 = vld [vmem:[#allocation8 + $0x8] sm:$0xff]
    %v1164 = vld [vmem:[#allocation8 + $0x10] sm:$0xff]
    %v1165 = vld [vmem:[#allocation8 + $0x18] sm:$0xff]
    %v1166 = vld [vmem:[#allocation8 + $0x20] sm:$0xff]
    %v1167 = vld [vmem:[#allocation8 + $0x28] sm:$0xff]
    %v1168 = vld [vmem:[#allocation8 + $0x30] sm:$0xff]
    %v1169 = vld [vmem:[#allocation8 + $0x38] sm:$0xff]
    %v1170 = vld [vmem:[#allocation8 + $0x40] sm:$0xff]
    %v1171 = vld [vmem:[#allocation8 + $0x48] sm:$0xff]
    %v1172 = vld [vmem:[#allocation8 + $0x50] sm:$0xff]
    %v1173 = vld [vmem:[#allocation8 + $0x58] sm:$0xff]
    %v1174 = vld [vmem:[#allocation8 + $0x60] sm:$0xff]
    %v1175 = vld [vmem:[#allocation8 + $0x68] sm:$0xff]
    %v1176 = vld [vmem:[#allocation8 + $0x70] sm:$0xff]
    %v1177 = vld [vmem:[#allocation8 + $0x78] sm:$0xff]
    %v1178 = vld [vmem:[#allocation8 + $0x80] sm:$0xff]
    %v1179 = vld [vmem:[#allocation8 + $0x88] sm:$0xff]
    %v1180 = vld [vmem:[#allocation8 + $0x90] sm:$0xff]
    %v1181 = vld [vmem:[#allocation8 + $0x98] sm:$0xff]
    %v1182 = vld [vmem:[#allocation8 + $0xa0] sm:$0xff]
    %v1183 = vld [vmem:[#allocation8 + $0xa8] sm:$0xff]
    %v1184 = vld [vmem:[#allocation8 + $0xb0] sm:$0xff]
    %v1185 = vld [vmem:[#allocation8 + $0xb8] sm:$0xff]
    %v1186 = vld [vmem:[#allocation8 + $0xc0] sm:$0xff]
    %v1187 = vld [vmem:[#allocation8 + $0xc8] sm:$0xff]
    %v1188 = vld [vmem:[#allocation8 + $0xd0] sm:$0xff]
    %v1189 = vld [vmem:[#allocation8 + $0xd8] sm:$0xff]
    %v1190 = vld [vmem:[#allocation8 + $0xe0] sm:$0xff]
    %v1191 = vld [vmem:[#allocation8 + $0xe8] sm:$0xff]
    %v1192 = vld [vmem:[#allocation8 + $0xf0] sm:$0xff]
    %v1193 = vld [vmem:[#allocation8 + $0xf8] sm:$0xff]
    %v1226 = vunpack.c.l.b16 %v1162
    %v1227 = vunpack.c.h.b16 %v1162
    %v1228 = vunpack.c.l.b16 %v1163
    %v1229 = vunpack.c.h.b16 %v1163
    %v1230 = vunpack.c.l.b16 %v1164
    %v1231 = vunpack.c.h.b16 %v1164
    %v1232 = vunpack.c.l.b16 %v1165
    %v1233 = vunpack.c.h.b16 %v1165
    %v1234 = vunpack.c.l.b16 %v1166
    %v1235 = vunpack.c.h.b16 %v1166
    %v1236 = vunpack.c.l.b16 %v1167
    %v1237 = vunpack.c.h.b16 %v1167
    %v1238 = vunpack.c.l.b16 %v1168
    %v1239 = vunpack.c.h.b16 %v1168
    %v1240 = vunpack.c.l.b16 %v1169
    %v1241 = vunpack.c.h.b16 %v1169
    %v1242 = vunpack.c.l.b16 %v1170
    %v1243 = vunpack.c.h.b16 %v1170
    %v1244 = vunpack.c.l.b16 %v1171
    %v1245 = vunpack.c.h.b16 %v1171
    %v1246 = vunpack.c.l.b16 %v1172
    %v1247 = vunpack.c.h.b16 %v1172
    %v1248 = vunpack.c.l.b16 %v1173
    %v1249 = vunpack.c.h.b16 %v1173
    %v1250 = vunpack.c.l.b16 %v1174
    %v1251 = vunpack.c.h.b16 %v1174
    %v1252 = vunpack.c.l.b16 %v1175
    %v1253 = vunpack.c.h.b16 %v1175
    %v1254 = vunpack.c.l.b16 %v1176
    %v1255 = vunpack.c.h.b16 %v1176
    %v1256 = vunpack.c.l.b16 %v1177
    %v1257 = vunpack.c.h.b16 %v1177
    %v1258 = vunpack.c.l.b16 %v1178
    %v1259 = vunpack.c.h.b16 %v1178
    %v1260 = vunpack.c.l.b16 %v1179
    %v1261 = vunpack.c.h.b16 %v1179
    %v1262 = vunpack.c.l.b16 %v1180
    %v1263 = vunpack.c.h.b16 %v1180
    %v1264 = vunpack.c.l.b16 %v1181
    %v1265 = vunpack.c.h.b16 %v1181
    %v1266 = vunpack.c.l.b16 %v1182
    %v1267 = vunpack.c.h.b16 %v1182
    %v1268 = vunpack.c.l.b16 %v1183
    %v1269 = vunpack.c.h.b16 %v1183
    %v1270 = vunpack.c.l.b16 %v1184
    %v1271 = vunpack.c.h.b16 %v1184
    %v1272 = vunpack.c.l.b16 %v1185
    %v1273 = vunpack.c.h.b16 %v1185
    %v1274 = vunpack.c.l.b16 %v1186
    %v1275 = vunpack.c.h.b16 %v1186
    %v1276 = vunpack.c.l.b16 %v1187
    %v1277 = vunpack.c.h.b16 %v1187
    %v1278 = vunpack.c.l.b16 %v1188
    %v1279 = vunpack.c.h.b16 %v1188
    %v1280 = vunpack.c.l.b16 %v1189
    %v1281 = vunpack.c.h.b16 %v1189
    %v1282 = vunpack.c.l.b16 %v1190
    %v1283 = vunpack.c.h.b16 %v1190
    %v1284 = vunpack.c.l.b16 %v1191
    %v1285 = vunpack.c.h.b16 %v1191
    %v1286 = vunpack.c.l.b16 %v1192
    %v1287 = vunpack.c.h.b16 %v1192
    %v1288 = vunpack.c.l.b16 %v1193
    %v1289 = vunpack.c.h.b16 %v1193
    %v1290 = vpack.c.b16 %v1230, %v1226
    %v1291 = vpack.c.b16 %v1231, %v1227
    %v1292 = vpack.c.b16 %v1232, %v1228
    %v1293 = vpack.c.b16 %v1233, %v1229
    %v1294 = vpack.c.b16 %v1238, %v1234
    %v1295 = vpack.c.b16 %v1239, %v1235
    %v1296 = vpack.c.b16 %v1240, %v1236
    %v1297 = vpack.c.b16 %v1241, %v1237
    %v1298 = vpack.c.b16 %v1246, %v1242
    %v1299 = vpack.c.b16 %v1247, %v1243
    %v1300 = vpack.c.b16 %v1248, %v1244
    %v1301 = vpack.c.b16 %v1249, %v1245
    %v1302 = vpack.c.b16 %v1254, %v1250
    %v1303 = vpack.c.b16 %v1255, %v1251
    %v1304 = vpack.c.b16 %v1256, %v1252
    %v1305 = vpack.c.b16 %v1257, %v1253
    %v1306 = vpack.c.b16 %v1262, %v1258
    %v1307 = vpack.c.b16 %v1263, %v1259
    %v1308 = vpack.c.b16 %v1264, %v1260
    %v1309 = vpack.c.b16 %v1265, %v1261
    %v1310 = vpack.c.b16 %v1270, %v1266
    %v1311 = vpack.c.b16 %v1271, %v1267
    %v1312 = vpack.c.b16 %v1272, %v1268
    %v1313 = vpack.c.b16 %v1273, %v1269
    %v1314 = vpack.c.b16 %v1278, %v1274
    %v1315 = vpack.c.b16 %v1279, %v1275
    %v1316 = vpack.c.b16 %v1280, %v1276
    %v1317 = vpack.c.b16 %v1281, %v1277
    %v1318 = vpack.c.b16 %v1286, %v1282
    %v1319 = vpack.c.b16 %v1287, %v1283
    %v1320 = vpack.c.b16 %v1288, %v1284
    %v1321 = vpack.c.b16 %v1289, %v1285
    %1354 = vmatprep.subr.bf16.mxu0 %v1291
    %1355 = vmatpush1.bf16.msra.mxu0 %v1290
    %1356 = vmatprep.subr.bf16.mxu0 %v1295
    %1357 = vmatpush1.bf16.msra.mxu0 %v1294
    %1358 = vmatprep.subr.bf16.mxu0 %v1299
    %1359 = vmatpush1.bf16.msra.mxu0 %v1298
    %1360 = vmatprep.subr.bf16.mxu0 %v1303
    %1361 = vmatpush1.bf16.msra.mxu0 %v1302
    %1362 = vmatprep.subr.bf16.mxu0 %v1307
    %1363 = vmatpush1.bf16.msra.mxu0 %v1306
    %1364 = vmatprep.subr.bf16.mxu0 %v1311
    %1365 = vmatpush1.bf16.msra.mxu0 %v1310
    %1366 = vmatprep.subr.bf16.mxu0 %v1315
    %1367 = vmatpush1.bf16.msra.mxu0 %v1314
    %1368 = vmatprep.subr.bf16.mxu0 %v1319
    %1369 = vmatpush1.bf16.msra.mxu0 %v1318
    %1370 = vmatprep.subr.bf16.mxu0 0
    %1371 = vmatpush1.bf16.msra.mxu0 0
    %1372 = vmatprep.subr.bf16.mxu0 0
    %1373 = vmatpush1.bf16.msra.mxu0 0
    %1374 = vmatprep.subr.bf16.mxu0 0
    %1375 = vmatpush1.bf16.msra.mxu0 0
    %1376 = vmatprep.subr.bf16.mxu0 0
    %1377 = vmatpush1.bf16.msra.mxu0 0
    %1378 = vmatprep.subr.bf16.mxu0 0
    %1379 = vmatpush1.bf16.msra.mxu0 0
    %1380 = vmatprep.subr.bf16.mxu0 0
    %1381 = vmatpush1.bf16.msra.mxu0 0
    %1382 = vmatprep.subr.bf16.mxu0 0
    %1383 = vmatpush1.bf16.msra.mxu0 0
    %1384 = vmatprep.subr.bf16.mxu0 0
    %1385 = vmatpush1.bf16.msra.mxu0 0
    %1386 = vmatprep.mubr.bf16.mxu0 0
    %1387 = vmatmul.mubr.bf16.gmra.mrb[0].mxu0 %v1160
    %v1388 = vpop.f32.mrb[0].mxu0
    %v1389 = vadd.f32 0.0, %v1388
    %v1390 = vpop.f32.mrb[0].mxu0
    %v1391 = vadd.f32 0.0, %v1390
    %v1392 = vpop.f32.mrb[0].mxu0
    %v1393 = vadd.f32 0.0, %v1392
    %v1394 = vpop.f32.mrb[0].mxu0
    %v1395 = vadd.f32 0.0, %v1394
    %1396 = vmatprep.mubr.bf16.mxu0 0
    %1397 = vmatmul.mubr.bf16.gmra.mrb[0].mxu0 %v1161
    %v1398 = vpop.f32.mrb[0].mxu0
    %v1399 = vadd.f32 0.0, %v1398
    %v1400 = vpop.f32.mrb[0].mxu0
    %v1401 = vadd.f32 0.0, %v1400
    %v1402 = vpop.f32.mrb[0].mxu0
    %v1403 = vadd.f32 0.0, %v1402
    %v1404 = vpop.f32.mrb[0].mxu0
    %v1405 = vadd.f32 0.0, %v1404
    %1406 = vdwg.mxu0
    %1407 = vmatprep.subr.bf16.mxu0 %v1293
    %1408 = vmatpush1.bf16.msra.mxu0 %v1292
    %1409 = vmatprep.subr.bf16.mxu0 %v1297
    %1410 = vmatpush1.bf16.msra.mxu0 %v1296
    %1411 = vmatprep.subr.bf16.mxu0 %v1301
    %1412 = vmatpush1.bf16.msra.mxu0 %v1300
    %1413 = vmatprep.subr.bf16.mxu0 %v1305
    %1414 = vmatpush1.bf16.msra.mxu0 %v1304
    %1415 = vmatprep.subr.bf16.mxu0 %v1309
    %1416 = vmatpush1.bf16.msra.mxu0 %v1308
    %1417 = vmatprep.subr.bf16.mxu0 %v1313
    %1418 = vmatpush1.bf16.msra.mxu0 %v1312
    %1419 = vmatprep.subr.bf16.mxu0 %v1317
    %1420 = vmatpush1.bf16.msra.mxu0 %v1316
    %1421 = vmatprep.subr.bf16.mxu0 %v1321
    %1422 = vmatpush1.bf16.msra.mxu0 %v1320
    %1423 = vmatprep.subr.bf16.mxu0 0
    %1424 = vmatpush1.bf16.msra.mxu0 0
    %1425 = vmatprep.subr.bf16.mxu0 0
    %1426 = vmatpush1.bf16.msra.mxu0 0
    %1427 = vmatprep.subr.bf16.mxu0 0
    %1428 = vmatpush1.bf16.msra.mxu0 0
    %1429 = vmatprep.subr.bf16.mxu0 0
    %1430 = vmatpush1.bf16.msra.mxu0 0
    %1431 = vmatprep.subr.bf16.mxu0 0
    %1432 = vmatpush1.bf16.msra.mxu0 0
    %1433 = vmatprep.subr.bf16.mxu0 0
    %1434 = vmatpush1.bf16.msra.mxu0 0
    %1435 = vmatprep.subr.bf16.mxu0 0
    %1436 = vmatpush1.bf16.msra.mxu0 0
    %1437 = vmatprep.subr.bf16.mxu0 0
    %1438 = vmatpush1.bf16.msra.mxu0 0
    %1439 = vmatprep.mubr.bf16.mxu0 0
    %1440 = vmatmul.mubr.bf16.gmra.mrb[0].mxu0 %v1160
    %v1441 = vpop.f32.mrb[0].mxu0
    %v1442 = vadd.f32 0.0, %v1441
    %v1443 = vpop.f32.mrb[0].mxu0
    %v1444 = vadd.f32 0.0, %v1443
    %v1445 = vpop.f32.mrb[0].mxu0
    %v1446 = vadd.f32 0.0, %v1445
    %v1447 = vpop.f32.mrb[0].mxu0
    %v1448 = vadd.f32 0.0, %v1447
    %1449 = vmatprep.mubr.bf16.mxu0 0
    %1450 = vmatmul.mubr.bf16.gmra.mrb[0].mxu0 %v1161
    %v1451 = vpop.f32.mrb[0].mxu0
    %v1452 = vadd.f32 0.0, %v1451
    %v1453 = vpop.f32.mrb[0].mxu0
    %v1454 = vadd.f32 0.0, %v1453
    %v1455 = vpop.f32.mrb[0].mxu0
    %v1456 = vadd.f32 0.0, %v1455
    %v1457 = vpop.f32.mrb[0].mxu0
    %v1458 = vadd.f32 0.0, %v1457
    %1459 = vdwg.mxu0
    %v1460 = vmul.f32 %v1389, %v1389
    %v1461 = vmul.f32 %v1391, %v1391
    %v1462 = vmul.f32 %v1442, %v1442
    %v1463 = vmul.f32 %v1444, %v1444
    %v1464 = vmul.f32 %v1393, %v1393
    %v1465 = vmul.f32 %v1395, %v1395
    %v1466 = vmul.f32 %v1446, %v1446
    %v1467 = vmul.f32 %v1448, %v1448
    %v1468 = vmul.f32 %v1399, %v1399
    %v1469 = vmul.f32 %v1401, %v1401
    %v1470 = vmul.f32 %v1452, %v1452
    %v1471 = vmul.f32 %v1454, %v1454
    %v1472 = vmul.f32 %v1403, %v1403
    %v1473 = vmul.f32 %v1405, %v1405
    %v1474 = vmul.f32 %v1456, %v1456
    %v1475 = vmul.f32 %v1458, %v1458
    %v1476 = vmul.f32 %v1389, %v1460
    %v1477 = vmul.f32 %v1391, %v1461
    %v1478 = vmul.f32 %v1442, %v1462
    %v1479 = vmul.f32 %v1444, %v1463
    %v1480 = vmul.f32 %v1393, %v1464
    %v1481 = vmul.f32 %v1395, %v1465
    %v1482 = vmul.f32 %v1446, %v1466
    %v1483 = vmul.f32 %v1448, %v1467
    %v1484 = vmul.f32 %v1399, %v1468
    %v1485 = vmul.f32 %v1401, %v1469
    %v1486 = vmul.f32 %v1452, %v1470
    %v1487 = vmul.f32 %v1454, %v1471
    %v1488 = vmul.f32 %v1403, %v1472
    %v1489 = vmul.f32 %v1405, %v1473
    %v1490 = vmul.f32 %v1456, %v1474
    %v1491 = vmul.f32 %v1458, %v1475
    %v1492 = vmul.f32 %v1476, 0.044715
    %v1493 = vmul.f32 %v1477, 0.044715
    %v1494 = vmul.f32 %v1478, 0.044715
    %v1495 = vmul.f32 %v1479, 0.044715
    %v1496 = vmul.f32 %v1480, 0.044715
    %v1497 = vmul.f32 %v1481, 0.044715
    %v1498 = vmul.f32 %v1482, 0.044715
    %v1499 = vmul.f32 %v1483, 0.044715
    %v1500 = vmul.f32 %v1484, 0.044715
    %v1501 = vmul.f32 %v1485, 0.044715
    %v1502 = vmul.f32 %v1486, 0.044715
    %v1503 = vmul.f32 %v1487, 0.044715
    %v1504 = vmul.f32 %v1488, 0.044715
    %v1505 = vmul.f32 %v1489, 0.044715
    %v1506 = vmul.f32 %v1490, 0.044715
    %v1507 = vmul.f32 %v1491, 0.044715
    %v1508 = vadd.f32 %v1389, %v1492
    %v1509 = vadd.f32 %v1391, %v1493
    %v1510 = vadd.f32 %v1442, %v1494
    %v1511 = vadd.f32 %v1444, %v1495
    %v1512 = vadd.f32 %v1393, %v1496
    %v1513 = vadd.f32 %v1395, %v1497
    %v1514 = vadd.f32 %v1446, %v1498
    %v1515 = vadd.f32 %v1448, %v1499
    %v1516 = vadd.f32 %v1399, %v1500
    %v1517 = vadd.f32 %v1401, %v1501
    %v1518 = vadd.f32 %v1452, %v1502
    %v1519 = vadd.f32 %v1454, %v1503
    %v1520 = vadd.f32 %v1403, %v1504
    %v1521 = vadd.f32 %v1405, %v1505
    %v1522 = vadd.f32 %v1456, %v1506
    %v1523 = vadd.f32 %v1458, %v1507
    %v1524 = vmul.f32 %v1508, 0.7978846
    %v1525 = vmul.f32 %v1509, 0.7978846
    %v1526 = vmul.f32 %v1510, 0.7978846
    %v1527 = vmul.f32 %v1511, 0.7978846
    %v1528 = vmul.f32 %v1512, 0.7978846
    %v1529 = vmul.f32 %v1513, 0.7978846
    %v1530 = vmul.f32 %v1514, 0.7978846
    %v1531 = vmul.f32 %v1515, 0.7978846
    %v1532 = vmul.f32 %v1516, 0.7978846
    %v1533 = vmul.f32 %v1517, 0.7978846
    %v1534 = vmul.f32 %v1518, 0.7978846
    %v1535 = vmul.f32 %v1519, 0.7978846
    %v1536 = vmul.f32 %v1520, 0.7978846
    %v1537 = vmul.f32 %v1521, 0.7978846
    %v1538 = vmul.f32 %v1522, 0.7978846
    %v1539 = vmul.f32 %v1523, 0.7978846
    %v1540 = vtanh.pop %v1524
    %v1541 = vtanh.pop %v1525
    %v1542 = vtanh.pop %v1526
    %v1543 = vtanh.pop %v1527
    %v1544 = vtanh.pop %v1528
    %v1545 = vtanh.pop %v1529
    %v1546 = vtanh.pop %v1530
    %v1547 = vtanh.pop %v1531
    %v1548 = vtanh.pop %v1532
    %v1549 = vtanh.pop %v1533
    %v1550 = vtanh.pop %v1534
    %v1551 = vtanh.pop %v1535
    %v1552 = vtanh.pop %v1536
    %v1553 = vtanh.pop %v1537
    %v1554 = vtanh.pop %v1538
    %v1555 = vtanh.pop %v1539
    %v1556 = vadd.f32 %v1540, 1.0
    %v1557 = vadd.f32 %v1541, 1.0
    %v1558 = vadd.f32 %v1542, 1.0
    %v1559 = vadd.f32 %v1543, 1.0
    %v1560 = vadd.f32 %v1544, 1.0
    %v1561 = vadd.f32 %v1545, 1.0
    %v1562 = vadd.f32 %v1546, 1.0
    %v1563 = vadd.f32 %v1547, 1.0
    %v1564 = vadd.f32 %v1548, 1.0
    %v1565 = vadd.f32 %v1549, 1.0
    %v1566 = vadd.f32 %v1550, 1.0
    %v1567 = vadd.f32 %v1551, 1.0
    %v1568 = vadd.f32 %v1552, 1.0
    %v1569 = vadd.f32 %v1553, 1.0
    %v1570 = vadd.f32 %v1554, 1.0
    %v1571 = vadd.f32 %v1555, 1.0
    %v1572 = vmul.f32 %v1556, 0.5
    %v1573 = vmul.f32 %v1557, 0.5
    %v1574 = vmul.f32 %v1558, 0.5
    %v1575 = vmul.f32 %v1559, 0.5
    %v1576 = vmul.f32 %v1560, 0.5
    %v1577 = vmul.f32 %v1561, 0.5
    %v1578 = vmul.f32 %v1562, 0.5
    %v1579 = vmul.f32 %v1563, 0.5
    %v1580 = vmul.f32 %v1564, 0.5
    %v1581 = vmul.f32 %v1565, 0.5
    %v1582 = vmul.f32 %v1566, 0.5
    %v1583 = vmul.f32 %v1567, 0.5
    %v1584 = vmul.f32 %v1568, 0.5
    %v1585 = vmul.f32 %v1569, 0.5
    %v1586 = vmul.f32 %v1570, 0.5
    %v1587 = vmul.f32 %v1571, 0.5
    %v1588 = vmul.f32 %v1389, %v1572
    %v1589 = vmul.f32 %v1391, %v1573
    %v1590 = vmul.f32 %v1442, %v1574
    %v1591 = vmul.f32 %v1444, %v1575
    %v1592 = vmul.f32 %v1393, %v1576
    %v1593 = vmul.f32 %v1395, %v1577
    %v1594 = vmul.f32 %v1446, %v1578
    %v1595 = vmul.f32 %v1448, %v1579
    %v1596 = vmul.f32 %v1399, %v1580
    %v1597 = vmul.f32 %v1401, %v1581
    %v1598 = vmul.f32 %v1452, %v1582
    %v1599 = vmul.f32 %v1454, %v1583
    %v1600 = vmul.f32 %v1403, %v1584
    %v1601 = vmul.f32 %v1405, %v1585
    %v1602 = vmul.f32 %v1456, %v1586
    %v1603 = vmul.f32 %v1458, %v1587
    %v1604 = vpack.c.bf16 %v1592, %v1588
    %v1605 = vpack.c.bf16 %v1593, %v1589
    %v1606 = vpack.c.bf16 %v1594, %v1590
    %v1607 = vpack.c.bf16 %v1595, %v1591
    %v1608 = vpack.c.bf16 %v1600, %v1596
    %v1609 = vpack.c.bf16 %v1601, %v1597
    %v1610 = vpack.c.bf16 %v1602, %v1598
    %v1611 = vpack.c.bf16 %v1603, %v1599
    %v1612 = vld [vmem:[#allocation10] sm:$0xf]
    %v1613 = vld [vmem:[#allocation10 + $0x4] sm:$0xf]
    %v1614 = vld [vmem:[#allocation10 + $0x8] sm:$0xf]
    %v1615 = vld [vmem:[#allocation10 + $0xc] sm:$0xf]
    %v1616 = vld [vmem:[#allocation10 + $0x10] sm:$0xf]
    %v1617 = vld [vmem:[#allocation10 + $0x14] sm:$0xf]
    %v1618 = vld [vmem:[#allocation10 + $0x18] sm:$0xf]
    %v1619 = vld [vmem:[#allocation10 + $0x1c] sm:$0xf]
    %v1620 = vld [vmem:[#allocation10 + $0x20] sm:$0xf]
    %v1621 = vld [vmem:[#allocation10 + $0x24] sm:$0xf]
    %v1622 = vld [vmem:[#allocation10 + $0x28] sm:$0xf]
    %v1623 = vld [vmem:[#allocation10 + $0x2c] sm:$0xf]
    %v1624 = vld [vmem:[#allocation10 + $0x30] sm:$0xf]
    %v1625 = vld [vmem:[#allocation10 + $0x34] sm:$0xf]
    %v1626 = vld [vmem:[#allocation10 + $0x38] sm:$0xf]
    %v1627 = vld [vmem:[#allocation10 + $0x3c] sm:$0xf]
    %v1628 = vld [vmem:[#allocation10 + $0x40] sm:$0xf]
    %v1629 = vld [vmem:[#allocation10 + $0x44] sm:$0xf]
    %v1630 = vld [vmem:[#allocation10 + $0x48] sm:$0xf]
    %v1631 = vld [vmem:[#allocation10 + $0x4c] sm:$0xf]
    %v1632 = vld [vmem:[#allocation10 + $0x50] sm:$0xf]
    %v1633 = vld [vmem:[#allocation10 + $0x54] sm:$0xf]
    %v1634 = vld [vmem:[#allocation10 + $0x58] sm:$0xf]
    %v1635 = vld [vmem:[#allocation10 + $0x5c] sm:$0xf]
    %v1636 = vld [vmem:[#allocation10 + $0x60] sm:$0xf]
    %v1637 = vld [vmem:[#allocation10 + $0x64] sm:$0xf]
    %v1638 = vld [vmem:[#allocation10 + $0x68] sm:$0xf]
    %v1639 = vld [vmem:[#allocation10 + $0x6c] sm:$0xf]
    %v1640 = vld [vmem:[#allocation10 + $0x70] sm:$0xf]
    %v1641 = vld [vmem:[#allocation10 + $0x74] sm:$0xf]
    %v1642 = vld [vmem:[#allocation10 + $0x78] sm:$0xf]
    %v1643 = vld [vmem:[#allocation10 + $0x7c] sm:$0xf]
    %v1644 = vld [vmem:[#allocation10 + $0x80] sm:$0xf]
    %v1645 = vld [vmem:[#allocation10 + $0x84] sm:$0xf]
    %v1646 = vld [vmem:[#allocation10 + $0x88] sm:$0xf]
    %v1647 = vld [vmem:[#allocation10 + $0x8c] sm:$0xf]
    %v1648 = vld [vmem:[#allocation10 + $0x90] sm:$0xf]
    %v1649 = vld [vmem:[#allocation10 + $0x94] sm:$0xf]
    %v1650 = vld [vmem:[#allocation10 + $0x98] sm:$0xf]
    %v1651 = vld [vmem:[#allocation10 + $0x9c] sm:$0xf]
    %v1652 = vld [vmem:[#allocation10 + $0xa0] sm:$0xf]
    %v1653 = vld [vmem:[#allocation10 + $0xa4] sm:$0xf]
    %v1654 = vld [vmem:[#allocation10 + $0xa8] sm:$0xf]
    %v1655 = vld [vmem:[#allocation10 + $0xac] sm:$0xf]
    %v1656 = vld [vmem:[#allocation10 + $0xb0] sm:$0xf]
    %v1657 = vld [vmem:[#allocation10 + $0xb4] sm:$0xf]
    %v1658 = vld [vmem:[#allocation10 + $0xb8] sm:$0xf]
    %v1659 = vld [vmem:[#allocation10 + $0xbc] sm:$0xf]
    %v1660 = vld [vmem:[#allocation10 + $0xc0] sm:$0xf]
    %v1661 = vld [vmem:[#allocation10 + $0xc4] sm:$0xf]
    %v1662 = vld [vmem:[#allocation10 + $0xc8] sm:$0xf]
    %v1663 = vld [vmem:[#allocation10 + $0xcc] sm:$0xf]
    %v1664 = vld [vmem:[#allocation10 + $0xd0] sm:$0xf]
    %v1665 = vld [vmem:[#allocation10 + $0xd4] sm:$0xf]
    %v1666 = vld [vmem:[#allocation10 + $0xd8] sm:$0xf]
    %v1667 = vld [vmem:[#allocation10 + $0xdc] sm:$0xf]
    %v1668 = vld [vmem:[#allocation10 + $0xe0] sm:$0xf]
    %v1669 = vld [vmem:[#allocation10 + $0xe4] sm:$0xf]
    %v1670 = vld [vmem:[#allocation10 + $0xe8] sm:$0xf]
    %v1671 = vld [vmem:[#allocation10 + $0xec] sm:$0xf]
    %v1672 = vld [vmem:[#allocation10 + $0xf0] sm:$0xf]
    %v1673 = vld [vmem:[#allocation10 + $0xf4] sm:$0xf]
    %v1674 = vld [vmem:[#allocation10 + $0xf8] sm:$0xf]
    %v1675 = vld [vmem:[#allocation10 + $0xfc] sm:$0xf]
    %v1740 = vunpack.c.l.b16 %v1612
    %v1741 = vunpack.c.l.b16 %v1613
    %v1742 = vunpack.c.l.b16 %v1614
    %v1743 = vunpack.c.l.b16 %v1615
    %v1744 = vunpack.c.l.b16 %v1616
    %v1745 = vunpack.c.l.b16 %v1617
    %v1746 = vunpack.c.l.b16 %v1618
    %v1747 = vunpack.c.l.b16 %v1619
    %v1748 = vunpack.c.l.b16 %v1620
    %v1749 = vunpack.c.l.b16 %v1621
    %v1750 = vunpack.c.l.b16 %v1622
    %v1751 = vunpack.c.l.b16 %v1623
    %v1752 = vunpack.c.l.b16 %v1624
    %v1753 = vunpack.c.l.b16 %v1625
    %v1754 = vunpack.c.l.b16 %v1626
    %v1755 = vunpack.c.l.b16 %v1627
    %v1756 = vunpack.c.l.b16 %v1628
    %v1757 = vunpack.c.l.b16 %v1629
    %v1758 = vunpack.c.l.b16 %v1630
    %v1759 = vunpack.c.l.b16 %v1631
    %v1760 = vunpack.c.l.b16 %v1632
    %v1761 = vunpack.c.l.b16 %v1633
    %v1762 = vunpack.c.l.b16 %v1634
    %v1763 = vunpack.c.l.b16 %v1635
    %v1764 = vunpack.c.l.b16 %v1636
    %v1765 = vunpack.c.l.b16 %v1637
    %v1766 = vunpack.c.l.b16 %v1638
    %v1767 = vunpack.c.l.b16 %v1639
    %v1768 = vunpack.c.l.b16 %v1640
    %v1769 = vunpack.c.l.b16 %v1641
    %v1770 = vunpack.c.l.b16 %v1642
    %v1771 = vunpack.c.l.b16 %v1643
    %v1772 = vunpack.c.l.b16 %v1644
    %v1773 = vunpack.c.l.b16 %v1645
    %v1774 = vunpack.c.l.b16 %v1646
    %v1775 = vunpack.c.l.b16 %v1647
    %v1776 = vunpack.c.l.b16 %v1648
    %v1777 = vunpack.c.l.b16 %v1649
    %v1778 = vunpack.c.l.b16 %v1650
    %v1779 = vunpack.c.l.b16 %v1651
    %v1780 = vunpack.c.l.b16 %v1652
    %v1781 = vunpack.c.l.b16 %v1653
    %v1782 = vunpack.c.l.b16 %v1654
    %v1783 = vunpack.c.l.b16 %v1655
    %v1784 = vunpack.c.l.b16 %v1656
    %v1785 = vunpack.c.l.b16 %v1657
    %v1786 = vunpack.c.l.b16 %v1658
    %v1787 = vunpack.c.l.b16 %v1659
    %v1788 = vunpack.c.l.b16 %v1660
    %v1789 = vunpack.c.l.b16 %v1661
    %v1790 = vunpack.c.l.b16 %v1662
    %v1791 = vunpack.c.l.b16 %v1663
    %v1792 = vunpack.c.l.b16 %v1664
    %v1793 = vunpack.c.l.b16 %v1665
    %v1794 = vunpack.c.l.b16 %v1666
    %v1795 = vunpack.c.l.b16 %v1667
    %v1796 = vunpack.c.l.b16 %v1668
    %v1797 = vunpack.c.l.b16 %v1669
    %v1798 = vunpack.c.l.b16 %v1670
    %v1799 = vunpack.c.l.b16 %v1671
    %v1800 = vunpack.c.l.b16 %v1672
    %v1801 = vunpack.c.l.b16 %v1673
    %v1802 = vunpack.c.l.b16 %v1674
    %v1803 = vunpack.c.l.b16 %v1675
    %v1804 = vpack.c.b16 %v1741, %v1740
    %v1805 = vpack.c.b16 %v1743, %v1742
    %v1806 = vpack.c.b16 %v1745, %v1744
    %v1807 = vpack.c.b16 %v1747, %v1746
    %v1808 = vpack.c.b16 %v1749, %v1748
    %v1809 = vpack.c.b16 %v1751, %v1750
    %v1810 = vpack.c.b16 %v1753, %v1752
    %v1811 = vpack.c.b16 %v1755, %v1754
    %v1812 = vpack.c.b16 %v1757, %v1756
    %v1813 = vpack.c.b16 %v1759, %v1758
    %v1814 = vpack.c.b16 %v1761, %v1760
    %v1815 = vpack.c.b16 %v1763, %v1762
    %v1816 = vpack.c.b16 %v1765, %v1764
    %v1817 = vpack.c.b16 %v1767, %v1766
    %v1818 = vpack.c.b16 %v1769, %v1768
    %v1819 = vpack.c.b16 %v1771, %v1770
    %v1820 = vpack.c.b16 %v1773, %v1772
    %v1821 = vpack.c.b16 %v1775, %v1774
    %v1822 = vpack.c.b16 %v1777, %v1776
    %v1823 = vpack.c.b16 %v1779, %v1778
    %v1824 = vpack.c.b16 %v1781, %v1780
    %v1825 = vpack.c.b16 %v1783, %v1782
    %v1826 = vpack.c.b16 %v1785, %v1784
    %v1827 = vpack.c.b16 %v1787, %v1786
    %v1828 = vpack.c.b16 %v1789, %v1788
    %v1829 = vpack.c.b16 %v1791, %v1790
    %v1830 = vpack.c.b16 %v1793, %v1792
    %v1831 = vpack.c.b16 %v1795, %v1794
    %v1832 = vpack.c.b16 %v1797, %v1796
    %v1833 = vpack.c.b16 %v1799, %v1798
    %v1834 = vpack.c.b16 %v1801, %v1800
    %v1835 = vpack.c.b16 %v1803, %v1802
    %1868 = vmatprep.subr.bf16.mxu0 0
    %1869 = vmatpush1.bf16.msra.mxu0 %v1804
    %1870 = vmatprep.subr.bf16.mxu0 0
    %1871 = vmatpush1.bf16.msra.mxu0 %v1805
    %1872 = vmatprep.subr.bf16.mxu0 0
    %1873 = vmatpush1.bf16.msra.mxu0 %v1806
    %1874 = vmatprep.subr.bf16.mxu0 0
    %1875 = vmatpush1.bf16.msra.mxu0 %v1807
    %1876 = vmatprep.subr.bf16.mxu0 0
    %1877 = vmatpush1.bf16.msra.mxu0 %v1808
    %1878 = vmatprep.subr.bf16.mxu0 0
    %1879 = vmatpush1.bf16.msra.mxu0 %v1809
    %1880 = vmatprep.subr.bf16.mxu0 0
    %1881 = vmatpush1.bf16.msra.mxu0 %v1810
    %1882 = vmatprep.subr.bf16.mxu0 0
    %1883 = vmatpush1.bf16.msra.mxu0 %v1811
    %1884 = vmatprep.subr.bf16.mxu0 0
    %1885 = vmatpush1.bf16.msra.mxu0 %v1812
    %1886 = vmatprep.subr.bf16.mxu0 0
    %1887 = vmatpush1.bf16.msra.mxu0 %v1813
    %1888 = vmatprep.subr.bf16.mxu0 0
    %1889 = vmatpush1.bf16.msra.mxu0 %v1814
    %1890 = vmatprep.subr.bf16.mxu0 0
    %1891 = vmatpush1.bf16.msra.mxu0 %v1815
    %1892 = vmatprep.subr.bf16.mxu0 0
    %1893 = vmatpush1.bf16.msra.mxu0 %v1816
    %1894 = vmatprep.subr.bf16.mxu0 0
    %1895 = vmatpush1.bf16.msra.mxu0 %v1817
    %1896 = vmatprep.subr.bf16.mxu0 0
    %1897 = vmatpush1.bf16.msra.mxu0 %v1818
    %1898 = vmatprep.subr.bf16.mxu0 0
    %1899 = vmatpush1.bf16.msra.mxu0 %v1819
    %1900 = vmatprep.mubr.bf16.mxu0 %v1605
    %1901 = vmatmul.mubr.bf16.gmra.mrb[0].mxu0 %v1604
    %v1902 = vpop.f32.mrb[0].mxu0
    %v1903 = vadd.f32 0.0, %v1902
    %v1904 = vpop.f32.mrb[0].mxu0
    %v1905 = vpop.f32.mrb[0].mxu0
    %v1906 = vadd.f32 0.0, %v1905
    %v1907 = vpop.f32.mrb[0].mxu0
    %1908 = vmatprep.mubr.bf16.mxu0 %v1609
    %1909 = vmatmul.mubr.bf16.gmra.mrb[0].mxu0 %v1608
    %v1910 = vpop.f32.mrb[0].mxu0
    %v1911 = vadd.f32 0.0, %v1910
    %v1912 = vpop.f32.mrb[0].mxu0
    %v1913 = vpop.f32.mrb[0].mxu0
    %v1914 = vadd.f32 0.0, %v1913
    %v1915 = vpop.f32.mrb[0].mxu0
    %1916 = vdwg.mxu0
    %1917 = vmatprep.subr.bf16.mxu0 0
    %1918 = vmatpush1.bf16.msra.mxu0 %v1820
    %1919 = vmatprep.subr.bf16.mxu0 0
    %1920 = vmatpush1.bf16.msra.mxu0 %v1821
    %1921 = vmatprep.subr.bf16.mxu0 0
    %1922 = vmatpush1.bf16.msra.mxu0 %v1822
    %1923 = vmatprep.subr.bf16.mxu0 0
    %1924 = vmatpush1.bf16.msra.mxu0 %v1823
    %1925 = vmatprep.subr.bf16.mxu0 0
    %1926 = vmatpush1.bf16.msra.mxu0 %v1824
    %1927 = vmatprep.subr.bf16.mxu0 0
    %1928 = vmatpush1.bf16.msra.mxu0 %v1825
    %1929 = vmatprep.subr.bf16.mxu0 0
    %1930 = vmatpush1.bf16.msra.mxu0 %v1826
    %1931 = vmatprep.subr.bf16.mxu0 0
    %1932 = vmatpush1.bf16.msra.mxu0 %v1827
    %1933 = vmatprep.subr.bf16.mxu0 0
    %1934 = vmatpush1.bf16.msra.mxu0 %v1828
    %1935 = vmatprep.subr.bf16.mxu0 0
    %1936 = vmatpush1.bf16.msra.mxu0 %v1829
    %1937 = vmatprep.subr.bf16.mxu0 0
    %1938 = vmatpush1.bf16.msra.mxu0 %v1830
    %1939 = vmatprep.subr.bf16.mxu0 0
    %1940 = vmatpush1.bf16.msra.mxu0 %v1831
    %1941 = vmatprep.subr.bf16.mxu0 0
    %1942 = vmatpush1.bf16.msra.mxu0 %v1832
    %1943 = vmatprep.subr.bf16.mxu0 0
    %1944 = vmatpush1.bf16.msra.mxu0 %v1833
    %1945 = vmatprep.subr.bf16.mxu0 0
    %1946 = vmatpush1.bf16.msra.mxu0 %v1834
    %1947 = vmatprep.subr.bf16.mxu0 0
    %1948 = vmatpush1.bf16.msra.mxu0 %v1835
    %1949 = vmatprep.mubr.bf16.mxu0 %v1607
    %1950 = vmatmul.mubr.bf16.gmra.mrb[0].mxu0 %v1606
    %v1951 = vpop.f32.mrb[0].mxu0
    %v1952 = vadd.f32 %v1903, %v1951
    %v1953 = vpop.f32.mrb[0].mxu0
    %v1954 = vpop.f32.mrb[0].mxu0
    %v1955 = vadd.f32 %v1906, %v1954
    %v1956 = vpop.f32.mrb[0].mxu0
    %1957 = vmatprep.mubr.bf16.mxu0 %v1611
    %1958 = vmatmul.mubr.bf16.gmra.mrb[0].mxu0 %v1610
    %v1959 = vpop.f32.mrb[0].mxu0
    %v1960 = vadd.f32 %v1911, %v1959
    %v1961 = vpop.f32.mrb[0].mxu0
    %v1962 = vpop.f32.mrb[0].mxu0
    %v1963 = vadd.f32 %v1914, %v1962
    %v1964 = vpop.f32.mrb[0].mxu0
    %1965 = vdwg.mxu0
    %v1966 = vadd.f32 %v1093, %v1952
    %v1967 = vadd.f32 %v1094, %v1955
    %v1968 = vadd.f32 %v1095, %v1960
    %v1969 = vadd.f32 %v1096, %v1963
    %1970 = vst [vmem:[#allocation11] sm:$0xff] %v1966
    %1971 = vst [vmem:[#allocation11 + $0x8] sm:$0xff] %v1967
    %1972 = vst [vmem:[#allocation11 + $0x10] sm:$0xff] %v1968
    %1973 = vst [vmem:[#allocation11 + $0x18] sm:$0xff] %v1969
    // Predicated region
    $region50: #{transformer_block.1} parent=1 // pred_check
      _
    $region51: #{transformer_block.1} parent=1 // pred_check_branch
      %1975 = sbr.rel (0) target = $region53
    $region52: #{transformer_block.1} parent=1 // pred_region
      %s1977 = ssub.s32 512, 512
      %1978 = vsyncadd [#allocation4], %s1977
      %s1979 = sshll.u32 [#allocation11], 4
      %s1980 = int_to_ptr.vmem [resolvable:$true] %s1979
      %1985 = dma.vmem_to_hbm [thread:$0]  %s1980, 512, %s7, [#allocation4], 128, 128, 8
    $region53: #{transformer_block.1} parent=1 // pred_fallthru
      _
    // Predicated region
    $region54: #{transformer_block.1} parent=1 // pred_check
      _
    $region55: #{transformer_block.1} parent=1 // pred_check_branch
      %1987 = sbr.rel (0) target = $region57
    $region56: #{transformer_block.1} parent=1 // pred_region
      %1988 = dma.done [#allocation4], 512
    $region57: #{transformer_block.1} parent=1 // pred_fallthru
      _
    %1989 = vsyncpa [#allocation3], 1
    %1990 = vsyncpa [#allocation6], 1
    %1991 = vsyncpa [#allocation9], 1
    %1992 = vsyncpa [#allocation4], 1

</llo_original>
